<compile_context>
chip_gen: v7x
topology: tpu7x:2x2x1
jax: 0.10.0
libtpu: 0.0.40
codegen_flags: <defaults>
</compile_context>

<pallas_src>
import functools

import jax
import jax.numpy as jnp
import numpy as np
from jax.experimental import pallas as pl
from jax.experimental.pallas import tpu as pltpu


def _round_up(n, m):
    return ((n + m - 1) // m) * m


def _write_unit_kernel(*refs, self_attention: bool, memory_gate: bool):
    refs = list(refs)
    o_ref = refs.pop()                      # output [tB, Dp] f32
    it = iter(refs)

    r_ref = next(it)                        # [tB, Dp] f32   read vector
    m_last_ref = next(it)                   # [tB, Dp] f32   memory_states[-1]
    w_cr_ref = next(it)                     # [Dp, Dp] bf16  concat-layer, read half (pre-T)
    w_cm_ref = next(it)                     # [Dp, Dp] bf16  concat-layer, memory half (pre-T)
    b_cat_ref = next(it)                    # [1, Dp]  f32

    c_last_ref = next(it) if (self_attention or memory_gate) else None   # [tB, Dp] f32

    if self_attention:
        c_prev_ref = next(it)               # [S, tB, Dp] bf16  ctrl_states[:-1]
        mem_ref = next(it)                  # [S, tB, Dp] bf16  memory_states
        w_attn_ref = next(it)               # [1, Dp]  f32
        w_sa_ref = next(it)                 # [Dp, Dp] bf16 (pre-T)
        w_ip_ref = next(it)                 # [Dp, Dp] bf16 (pre-T)
        b_proj_ref = next(it)               # [1, Dp]  f32  = b_sa + b_ip
    if memory_gate:
        w_ctrl_ref = next(it)               # [1, Dp]  f32
        b_ctrl_ref = next(it)               # SMEM (1,) f32

    m_last = m_last_ref[...]

    # mi_info = concat_layer([read | memory]) as two bf16 MXU dots (no concat).
    mi_info = (
        jnp.dot(r_ref[...].astype(jnp.bfloat16), w_cr_ref[...],
                preferred_element_type=jnp.float32)
        + jnp.dot(m_last.astype(jnp.bfloat16), w_cm_ref[...],
                  preferred_element_type=jnp.float32)
        + b_cat_ref[...]
    )
    next_memory = mi_info

    if self_attention:
        S = c_prev_ref.shape[0]
        # score[b,s] = sum_d (c_last[b,d]*w_attn[d]) * c_prev[s,b,d]
        # (the attn bias is constant per row and cancels in the softmax)
        q = c_last_ref[...] * w_attn_ref[...]                            # [tB, Dp] f32

        # Single online-softmax pass over S: per-step [tB, Dp] slices only,
        # no [tB, S, Dp] broadcast temporaries, accumulation in f32.
        # TODO(synk): for large S (>=128 after padding) switch the D/S
        # contractions to lax.dot_general batched matmuls on the MXU and/or
        # split S onto a second 'arbitrary' grid axis to overlap its DMA.
        sc = jnp.sum(q * c_prev_ref[0].astype(jnp.float32),
                     axis=-1, keepdims=True)                             # [tB, 1]
        m_run = sc
        l_run = jnp.ones_like(sc)
        acc = mem_ref[0].astype(jnp.float32)                             # [tB, Dp]
        for s in range(1, S):
            sc = jnp.sum(q * c_prev_ref[s].astype(jnp.float32),
                         axis=-1, keepdims=True)
            m_new = jnp.maximum(m_run, sc)
            alpha = jnp.exp(m_run - m_new)
            p = jnp.exp(sc - m_new)
            l_run = alpha * l_run + p
            acc = alpha * acc + p * mem_ref[s].astype(jnp.float32)
            m_run = m_new
        mi_sa = acc * pl.reciprocal(l_run, approx=True)                  # [tB, Dp]

        next_memory = (
            jnp.dot(mi_sa.astype(jnp.bfloat16), w_sa_ref[...],
                    preferred_element_type=jnp.float32)
            + jnp.dot(mi_info.astype(jnp.bfloat16), w_ip_ref[...],
                      preferred_element_type=jnp.float32)
            + b_proj_ref[...]
        )

    if memory_gate:
        gate_logit = (jnp.sum(c_last_ref[...] * w_ctrl_ref[...],
                              axis=-1, keepdims=True) + b_ctrl_ref[0])   # [tB, 1]
        gate = jax.nn.sigmoid(gate_logit)
        next_memory = gate * m_last + (1.0 - gate) * next_memory

    o_ref[...] = next_memory.astype(o_ref.dtype)


def init_params(key, dim):
    ks = jax.random.split(key, 10)
    scale = 0.05
    return {
        # PyTorch linear(2*dim, dim): weight [dim, 2*dim], bias [dim]
        "w_cat": scale * jax.random.normal(ks[0], (dim, 2 * dim), jnp.float32),
        "b_cat": scale * jax.random.normal(ks[1], (dim,), jnp.float32),
        # attn: linear(dim, 1)
        "w_attn": scale * jax.random.normal(ks[2], (1, dim), jnp.float32),
        "b_attn": scale * jax.random.normal(ks[3], (1,), jnp.float32),
        # mi_sa_proj / mi_info_proj: linear(dim, dim)
        "w_sa": scale * jax.random.normal(ks[4], (dim, dim), jnp.float32),
        "b_sa": scale * jax.random.normal(ks[5], (dim,), jnp.float32),
        "w_ip": scale * jax.random.normal(ks[6], (dim, dim), jnp.float32),
        "b_ip": scale * jax.random.normal(ks[7], (dim,), jnp.float32),
        # control: linear(dim, 1)
        "w_ctrl": scale * jax.random.normal(ks[8], (1, dim), jnp.float32),
        "b_ctrl": scale * jax.random.normal(ks[9], (1,), jnp.float32),
    }


def write_unit(memory_states, read_vector, ctrl_states, params,
               *, self_attention=True, memory_gate=True):
    """memory_states / ctrl_states: lists of [B, D] arrays; read_vector: [B, D]."""
    # Stack directly with S on the leading axis (no wrapper transpose needed).
    M = jnp.stack(memory_states, axis=0).astype(jnp.float32)     # [S, B, D]
    C = jnp.stack(ctrl_states, axis=0).astype(jnp.float32)       # [S+1, B, D]
    r = read_vector.astype(jnp.float32)
    S, B, D = M.shape
    assert C.shape == (S + 1, B, D)

    # Lane-dense / MXU-friendly padded sizes; 16-row sublane multiple (bf16-safe).
    Dp = _round_up(D, 128)

    # Batch tile sized against a conservative VMEM budget so the two
    # double-buffered bf16 [S, tB, Dp] streams stay well under the scoped
    # default even on v7x (64 MiB physical / 32 MiB scoped).
    # TODO(synk): raise the cap to 256 on v6e (2x256x256 MXU, 128 MiB VMEM).
    cap = 128
    if self_attention:
        bytes_per_batch_row = 2 * 2 * S * Dp * 2      # 2 tensors x 2 buffers x bf16
        budget = 8 * 1024 * 1024
        cap = min(128, max(16, (budget // bytes_per_batch_row) // 16 * 16))
    tile_B = min(_round_up(B, 16), cap)
    B_pad = _round_up(B, tile_B)
    nb = B_pad // tile_B

    def pad2(x, rows, cols, dtype=jnp.float32):
        return jnp.pad(x, ((0, rows - x.shape[0]),
                           (0, cols - x.shape[1]))).astype(dtype)

    def pad3(x, d0, d1, d2, dtype):
        return jnp.pad(x, ((0, d0 - x.shape[0]), (0, d1 - x.shape[1]),
                           (0, d2 - x.shape[2]))).astype(dtype)

    m_last = M[-1]                      # memory_states[-1]     [B, D]
    c_last = C[-1]                      # ctrl_states[-1]       [B, D]
    c_prev = C[:-1]                     # ctrl_states[:-1]      [S, B, D]

    # Concat-layer weight split into read / memory halves, pre-transposed to
    # [in, out], zero-padded (padded lanes contribute exactly 0), bf16 for MXU.
    w_cat = params["w_cat"].astype(jnp.float32)                  # [D, 2D] (out, in)
    w_cr = jnp.zeros((Dp, Dp), jnp.float32).at[:D, :D].set(w_cat[:, :D].T)
    w_cm = jnp.zeros((Dp, Dp), jnp.float32).at[:D, :D].set(w_cat[:, D:].T)
    b_cat_p = pad2(params["b_cat"].reshape(1, D), 1, Dp)

    args = [pad2(r, B_pad, Dp), pad2(m_last, B_pad, Dp),
            w_cr.astype(jnp.bfloat16), w_cm.astype(jnp.bfloat16), b_cat_p]
    in_specs = [
        pl.BlockSpec((tile_B, Dp), lambda b: (b, 0)),
        pl.BlockSpec((tile_B, Dp), lambda b: (b, 0)),
        pl.BlockSpec((Dp, Dp), lambda b: (0, 0)),       # weights: VMEM-resident
        pl.BlockSpec((Dp, Dp), lambda b: (0, 0)),
        pl.BlockSpec((1, Dp), lambda b: (0, 0)),
    ]

    if self_attention or memory_gate:
        args.append(pad2(c_last, B_pad, Dp))
        in_specs.append(pl.BlockSpec((tile_B, Dp), lambda b: (b, 0)))

    if self_attention:
        w_sa_t = jnp.zeros((Dp, Dp), jnp.float32).at[:D, :D].set(
            params["w_sa"].astype(jnp.float32).T)
        w_ip_t = jnp.zeros((Dp, Dp), jnp.float32).at[:D, :D].set(
            params["w_ip"].astype(jnp.float32).T)
        b_proj_p = pad2((params["b_sa"] + params["b_ip"]).reshape(1, D)
                        .astype(jnp.float32), 1, Dp)
        w_attn_p = pad2(params["w_attn"].astype(jnp.float32), 1, Dp)
        # NOTE: b_attn is intentionally not shipped (softmax-invariant constant).
        # The two dominant [S, B, D] streams travel as bf16 (half the HBM bytes).
        args += [pad3(c_prev, S, B_pad, Dp, jnp.bfloat16),
                 pad3(M, S, B_pad, Dp, jnp.bfloat16),
                 w_attn_p, w_sa_t.astype(jnp.bfloat16),
                 w_ip_t.astype(jnp.bfloat16), b_proj_p]
        # TODO(synk): add pipeline_mode=pl.Buffered(3) on the two 3-D streams
        # if profiling shows exposed DMA at grid-step boundaries.
        in_specs += [
            pl.BlockSpec((S, tile_B, Dp), lambda b: (0, b, 0)),
            pl.BlockSpec((S, tile_B, Dp), lambda b: (0, b, 0)),
            pl.BlockSpec((1, Dp), lambda b: (0, 0)),
            pl.BlockSpec((Dp, Dp), lambda b: (0, 0)),
            pl.BlockSpec((Dp, Dp), lambda b: (0, 0)),
            pl.BlockSpec((1, Dp), lambda b: (0, 0)),
        ]

    if memory_gate:
        w_ctrl_p = pad2(params["w_ctrl"].astype(jnp.float32), 1, Dp)
        b_ctrl_s = params["b_ctrl"].reshape(1).astype(jnp.float32)
        args += [w_ctrl_p, b_ctrl_s]
        in_specs += [
            pl.BlockSpec((1, Dp), lambda b: (0, 0)),
            pl.BlockSpec((1,), lambda b: (0,),
                         memory_space=pltpu.MemorySpace.SMEM),   # scalar gate bias
        ]

    kernel = functools.partial(_write_unit_kernel,
                               self_attention=self_attention,
                               memory_gate=memory_gate)

    out_padded = pl.pallas_call(
        kernel,
        out_shape=jax.ShapeDtypeStruct((B_pad, Dp), jnp.float32),
        grid=(nb,),
        in_specs=in_specs,
        out_specs=pl.BlockSpec((tile_B, Dp), lambda b: (b, 0)),
        compiler_params=pltpu.CompilerParams(
            dimension_semantics=("parallel",)),   # shards batch tiles across TCs on v7x
    )(*args)

    return out_padded[:B, :D]


def write_unit_reference(memory_states, read_vector, ctrl_states, params,
                         *, self_attention=True, memory_gate=True):
    """Pure-JAX f32 reference mirroring the PyTorch forward exactly."""
    memory_state = memory_states[-1]
    x = jnp.concatenate([read_vector, memory_state], axis=1)          # [B, 2D]
    mi_info = x @ params["w_cat"].T + params["b_cat"]                 # [B, D]
    nxt = mi_info
    if self_attention:
        controls_cat = jnp.stack(ctrl_states[:-1], axis=2)            # [B, D, S]
        attn = ctrl_states[-1][:, :, None] * controls_cat             # [B, D, S]
        attn = jnp.transpose(attn, (0, 2, 1)) @ params["w_attn"].T + params["b_attn"]
        attn = jax.nn.softmax(attn, axis=1)                           # [B, S, 1]
        attn = jnp.transpose(attn, (0, 2, 1))                         # [B, 1, S]
        memories_cat = jnp.stack(memory_states, axis=2)               # [B, D, S]
        mi_sa = jnp.sum(attn * memories_cat, axis=2)                  # [B, D]
        nxt = (mi_sa @ params["w_sa"].T + params["b_sa"]
               + mi_info @ params["w_ip"].T + params["b_ip"])
    if memory_gate:
        gate = jax.nn.sigmoid(ctrl_states[-1] @ params["w_ctrl"].T + params["b_ctrl"])
        nxt = gate * memory_state + (1.0 - gate) * nxt
    return nxt


if __name__ == "__main__":
    B, D, S = 2, 32, 8          # batch, hidden dim, number of previous memory states
    key = jax.random.PRNGKey(0)
    k_par, k_mem, k_ctrl, k_read = jax.random.split(key, 4)

    params = init_params(k_par, D)

    memory_states = [jax.random.normal(k, (B, D), jnp.float32)
                     for k in jax.random.split(k_mem, S)]
    ctrl_states = [jax.random.normal(k, (B, D), jnp.float32)
                   for k in jax.random.split(k_ctrl, S + 1)]
    read_vector = jax.random.normal(k_read, (B, D), jnp.float32)

    for sa in (True, False):
        for mg in (True, False):
            out = write_unit(memory_states, read_vector, ctrl_states, params,
                             self_attention=sa, memory_gate=mg)
            out = jax.block_until_ready(out)
            ref = write_unit_reference(memory_states, read_vector, ctrl_states, params,
                                       self_attention=sa, memory_gate=mg)
            # Tolerance loosened: bf16 streams + bf16 MXU operands + approx recip.
            np.testing.assert_allclose(np.asarray(out), np.asarray(ref),
                                       rtol=2e-2, atol=2e-2)

    print("KERNEL_OK")
</pallas_src>

<mosaic_0001>
module attributes {stable_mosaic.version = 11 : i64} {
  func.func @_write_unit_kernel(%arg0: i32, %arg1: memref<16x128xf32, #tpu.memory_space<vmem>>, %arg2: memref<16x128xf32, #tpu.memory_space<vmem>>, %arg3: memref<128x128xbf16, #tpu.memory_space<vmem>>, %arg4: memref<128x128xbf16, #tpu.memory_space<vmem>>, %arg5: memref<1x128xf32, #tpu.memory_space<vmem>>, %arg6: memref<16x128xf32, #tpu.memory_space<vmem>>, %arg7: memref<8x16x128xbf16, #tpu.memory_space<vmem>>, %arg8: memref<8x16x128xbf16, #tpu.memory_space<vmem>>, %arg9: memref<1x128xf32, #tpu.memory_space<vmem>>, %arg10: memref<128x128xbf16, #tpu.memory_space<vmem>>, %arg11: memref<128x128xbf16, #tpu.memory_space<vmem>>, %arg12: memref<1x128xf32, #tpu.memory_space<vmem>>, %arg13: memref<1x128xf32, #tpu.memory_space<vmem>>, %arg14: memref<1xf32, #tpu.memory_space<smem>>, %arg15: memref<16x128xf32, #tpu.memory_space<vmem>>) attributes {dimension_semantics = [#tpu.dimension_semantics<parallel>], iteration_bounds = array<i64: 1>, scalar_prefetch = 0 : i64, scratch_operands = 0 : i64, tpu.core_type = #tpu.core_type<tc>, window_params = [{transform_indices = @transform_0, window_bounds = array<i64: 16, 128>}, {transform_indices = @transform_1, window_bounds = array<i64: 16, 128>}, {pipeline_mode = #tpu.pipeline_mode<synchronous>, transform_indices = @transform_2, window_bounds = array<i64: 128, 128>}, {pipeline_mode = #tpu.pipeline_mode<synchronous>, transform_indices = @transform_3, window_bounds = array<i64: 128, 128>}, {pipeline_mode = #tpu.pipeline_mode<synchronous>, transform_indices = @transform_4, window_bounds = array<i64: 1, 128>}, {transform_indices = @transform_5, window_bounds = array<i64: 16, 128>}, {transform_indices = @transform_6, window_bounds = array<i64: 8, 16, 128>}, {transform_indices = @transform_7, window_bounds = array<i64: 8, 16, 128>}, {pipeline_mode = #tpu.pipeline_mode<synchronous>, transform_indices = @transform_8, window_bounds = array<i64: 1, 128>}, {pipeline_mode = #tpu.pipeline_mode<synchronous>, transform_indices = @transform_9, window_bounds = array<i64: 128, 128>}, {pipeline_mode = #tpu.pipeline_mode<synchronous>, transform_indices = @transform_10, window_bounds = array<i64: 128, 128>}, {pipeline_mode = #tpu.pipeline_mode<synchronous>, transform_indices = @transform_11, window_bounds = array<i64: 1, 128>}, {pipeline_mode = #tpu.pipeline_mode<synchronous>, transform_indices = @transform_12, window_bounds = array<i64: 1, 128>}, {transform_indices = @transform_13, window_bounds = array<i64: 1>}, {transform_indices = @transform_14, window_bounds = array<i64: 16, 128>}]} {
    %c0 = arith.constant 0 : index
    %c0_0 = arith.constant 0 : index
    %0 = vector.load %arg2[%c0, %c0_0] : memref<16x128xf32, #tpu.memory_space<vmem>>, vector<16x128xf32>
    %c0_1 = arith.constant 0 : index
    %c0_2 = arith.constant 0 : index
    %1 = vector.load %arg1[%c0_1, %c0_2] : memref<16x128xf32, #tpu.memory_space<vmem>>, vector<16x128xf32>
    %2 = arith.truncf %1 : vector<16x128xf32> to vector<16x128xbf16>
    %c0_3 = arith.constant 0 : index
    %c0_4 = arith.constant 0 : index
    %3 = vector.load %arg3[%c0_3, %c0_4] : memref<128x128xbf16, #tpu.memory_space<vmem>>, vector<128x128xbf16>
    %cst = arith.constant dense<0.000000e+00> : vector<16x128xf32>
    %4 = tpu.matmul %2, %3, %cst {dimension_numbers = #tpu.dot_dimension_numbers<[1], [0], [0], [1], [0, 0, 1, 1], [], []>} : vector<16x128xbf16>, vector<128x128xbf16>, vector<16x128xf32> -> vector<16x128xf32>
    %5 = arith.truncf %0 : vector<16x128xf32> to vector<16x128xbf16>
    %c0_5 = arith.constant 0 : index
    %c0_6 = arith.constant 0 : index
    %6 = vector.load %arg4[%c0_5, %c0_6] : memref<128x128xbf16, #tpu.memory_space<vmem>>, vector<128x128xbf16>
    %cst_7 = arith.constant dense<0.000000e+00> : vector<16x128xf32>
    %7 = tpu.matmul %5, %6, %cst_7 {dimension_numbers = #tpu.dot_dimension_numbers<[1], [0], [0], [1], [0, 0, 1, 1], [], []>} : vector<16x128xbf16>, vector<128x128xbf16>, vector<16x128xf32> -> vector<16x128xf32>
    %8 = arith.addf %4, %7 : vector<16x128xf32>
    %c0_8 = arith.constant 0 : index
    %c0_9 = arith.constant 0 : index
    %9 = vector.load %arg5[%c0_8, %c0_9] : memref<1x128xf32, #tpu.memory_space<vmem>>, vector<1x128xf32>
    %10 = vector.broadcast %9 : vector<1x128xf32> to vector<16x128xf32>
    %11 = arith.addf %8, %10 : vector<16x128xf32>
    %c0_10 = arith.constant 0 : index
    %c0_11 = arith.constant 0 : index
    %12 = vector.load %arg6[%c0_10, %c0_11] : memref<16x128xf32, #tpu.memory_space<vmem>>, vector<16x128xf32>
    %c0_12 = arith.constant 0 : index
    %c0_13 = arith.constant 0 : index
    %13 = vector.load %arg9[%c0_12, %c0_13] : memref<1x128xf32, #tpu.memory_space<vmem>>, vector<1x128xf32>
    %14 = vector.broadcast %13 : vector<1x128xf32> to vector<16x128xf32>
    %15 = arith.mulf %12, %14 : vector<16x128xf32>
    %c0_14 = arith.constant 0 : index
    %c0_15 = arith.constant 0 : index
    %c0_16 = arith.constant 0 : index
    %16 = vector.load %arg7[%c0_14, %c0_15, %c0_16] : memref<8x16x128xbf16, #tpu.memory_space<vmem>>, vector<1x16x128xbf16>
    %17 = vector.shape_cast %16 : vector<1x16x128xbf16> to vector<16x128xbf16>
    %18 = arith.extf %17 : vector<16x128xbf16> to vector<16x128xf32>
    %19 = arith.mulf %15, %18 : vector<16x128xf32>
    %cst_17 = arith.constant dense<0.000000e+00> : vector<16xf32>
    %20 = vector.multi_reduction <add>, %19, %cst_17 [1] : vector<16x128xf32> to vector<16xf32>
    %21 = vector.shape_cast %20 : vector<16xf32> to vector<16x1xf32>
    %cst_18 = arith.constant 1.000000e+00 : f32
    %22 = vector.broadcast %cst_18 : f32 to vector<16x1xf32>
    %c0_19 = arith.constant 0 : index
    %c0_20 = arith.constant 0 : index
    %c0_21 = arith.constant 0 : index
    %23 = vector.load %arg8[%c0_19, %c0_20, %c0_21] : memref<8x16x128xbf16, #tpu.memory_space<vmem>>, vector<1x16x128xbf16>
    %24 = vector.shape_cast %23 : vector<1x16x128xbf16> to vector<16x128xbf16>
    %25 = arith.extf %24 : vector<16x128xbf16> to vector<16x128xf32>
    %c1 = arith.constant 1 : index
    %c0_22 = arith.constant 0 : index
    %c0_23 = arith.constant 0 : index
    %26 = vector.load %arg7[%c1, %c0_22, %c0_23] : memref<8x16x128xbf16, #tpu.memory_space<vmem>>, vector<1x16x128xbf16>
    %27 = vector.shape_cast %26 : vector<1x16x128xbf16> to vector<16x128xbf16>
    %28 = arith.extf %27 : vector<16x128xbf16> to vector<16x128xf32>
    %29 = arith.mulf %15, %28 : vector<16x128xf32>
    %cst_24 = arith.constant dense<0.000000e+00> : vector<16xf32>
    %30 = vector.multi_reduction <add>, %29, %cst_24 [1] : vector<16x128xf32> to vector<16xf32>
    %31 = vector.shape_cast %30 : vector<16xf32> to vector<16x1xf32>
    %32 = arith.maximumf %21, %31 : vector<16x1xf32>
    %33 = arith.subf %21, %32 : vector<16x1xf32>
    %34 = math.exp %33 : vector<16x1xf32>
    %35 = arith.subf %31, %32 : vector<16x1xf32>
    %36 = math.exp %35 : vector<16x1xf32>
    %37 = arith.mulf %34, %22 : vector<16x1xf32>
    %38 = arith.addf %37, %36 : vector<16x1xf32>
    %39 = vector.broadcast %34 : vector<16x1xf32> to vector<16x128xf32>
    %40 = arith.mulf %39, %25 : vector<16x128xf32>
    %c1_25 = arith.constant 1 : index
    %c0_26 = arith.constant 0 : index
    %c0_27 = arith.constant 0 : index
    %41 = vector.load %arg8[%c1_25, %c0_26, %c0_27] : memref<8x16x128xbf16, #tpu.memory_space<vmem>>, vector<1x16x128xbf16>
    %42 = vector.shape_cast %41 : vector<1x16x128xbf16> to vector<16x128xbf16>
    %43 = arith.extf %42 : vector<16x128xbf16> to vector<16x128xf32>
    %44 = vector.broadcast %36 : vector<16x1xf32> to vector<16x128xf32>
    %45 = arith.mulf %44, %43 : vector<16x128xf32>
    %46 = arith.addf %40, %45 : vector<16x128xf32>
    %c2 = arith.constant 2 : index
    %c0_28 = arith.constant 0 : index
    %c0_29 = arith.constant 0 : index
    %47 = vector.load %arg7[%c2, %c0_28, %c0_29] : memref<8x16x128xbf16, #tpu.memory_space<vmem>>, vector<1x16x128xbf16>
    %48 = vector.shape_cast %47 : vector<1x16x128xbf16> to vector<16x128xbf16>
    %49 = arith.extf %48 : vector<16x128xbf16> to vector<16x128xf32>
    %50 = arith.mulf %15, %49 : vector<16x128xf32>
    %cst_30 = arith.constant dense<0.000000e+00> : vector<16xf32>
    %51 = vector.multi_reduction <add>, %50, %cst_30 [1] : vector<16x128xf32> to vector<16xf32>
    %52 = vector.shape_cast %51 : vector<16xf32> to vector<16x1xf32>
    %53 = arith.maximumf %32, %52 : vector<16x1xf32>
    %54 = arith.subf %32, %53 : vector<16x1xf32>
    %55 = math.exp %54 : vector<16x1xf32>
    %56 = arith.subf %52, %53 : vector<16x1xf32>
    %57 = math.exp %56 : vector<16x1xf32>
    %58 = arith.mulf %55, %38 : vector<16x1xf32>
    %59 = arith.addf %58, %57 : vector<16x1xf32>
    %60 = vector.broadcast %55 : vector<16x1xf32> to vector<16x128xf32>
    %61 = arith.mulf %60, %46 : vector<16x128xf32>
    %c2_31 = arith.constant 2 : index
    %c0_32 = arith.constant 0 : index
    %c0_33 = arith.constant 0 : index
    %62 = vector.load %arg8[%c2_31, %c0_32, %c0_33] : memref<8x16x128xbf16, #tpu.memory_space<vmem>>, vector<1x16x128xbf16>
    %63 = vector.shape_cast %62 : vector<1x16x128xbf16> to vector<16x128xbf16>
    %64 = arith.extf %63 : vector<16x128xbf16> to vector<16x128xf32>
    %65 = vector.broadcast %57 : vector<16x1xf32> to vector<16x128xf32>
    %66 = arith.mulf %65, %64 : vector<16x128xf32>
    %67 = arith.addf %61, %66 : vector<16x128xf32>
    %c3 = arith.constant 3 : index
    %c0_34 = arith.constant 0 : index
    %c0_35 = arith.constant 0 : index
    %68 = vector.load %arg7[%c3, %c0_34, %c0_35] : memref<8x16x128xbf16, #tpu.memory_space<vmem>>, vector<1x16x128xbf16>
    %69 = vector.shape_cast %68 : vector<1x16x128xbf16> to vector<16x128xbf16>
    %70 = arith.extf %69 : vector<16x128xbf16> to vector<16x128xf32>
    %71 = arith.mulf %15, %70 : vector<16x128xf32>
    %cst_36 = arith.constant dense<0.000000e+00> : vector<16xf32>
    %72 = vector.multi_reduction <add>, %71, %cst_36 [1] : vector<16x128xf32> to vector<16xf32>
    %73 = vector.shape_cast %72 : vector<16xf32> to vector<16x1xf32>
    %74 = arith.maximumf %53, %73 : vector<16x1xf32>
    %75 = arith.subf %53, %74 : vector<16x1xf32>
    %76 = math.exp %75 : vector<16x1xf32>
    %77 = arith.subf %73, %74 : vector<16x1xf32>
    %78 = math.exp %77 : vector<16x1xf32>
    %79 = arith.mulf %76, %59 : vector<16x1xf32>
    %80 = arith.addf %79, %78 : vector<16x1xf32>
    %81 = vector.broadcast %76 : vector<16x1xf32> to vector<16x128xf32>
    %82 = arith.mulf %81, %67 : vector<16x128xf32>
    %c3_37 = arith.constant 3 : index
    %c0_38 = arith.constant 0 : index
    %c0_39 = arith.constant 0 : index
    %83 = vector.load %arg8[%c3_37, %c0_38, %c0_39] : memref<8x16x128xbf16, #tpu.memory_space<vmem>>, vector<1x16x128xbf16>
    %84 = vector.shape_cast %83 : vector<1x16x128xbf16> to vector<16x128xbf16>
    %85 = arith.extf %84 : vector<16x128xbf16> to vector<16x128xf32>
    %86 = vector.broadcast %78 : vector<16x1xf32> to vector<16x128xf32>
    %87 = arith.mulf %86, %85 : vector<16x128xf32>
    %88 = arith.addf %82, %87 : vector<16x128xf32>
    %c4 = arith.constant 4 : index
    %c0_40 = arith.constant 0 : index
    %c0_41 = arith.constant 0 : index
    %89 = vector.load %arg7[%c4, %c0_40, %c0_41] : memref<8x16x128xbf16, #tpu.memory_space<vmem>>, vector<1x16x128xbf16>
    %90 = vector.shape_cast %89 : vector<1x16x128xbf16> to vector<16x128xbf16>
    %91 = arith.extf %90 : vector<16x128xbf16> to vector<16x128xf32>
    %92 = arith.mulf %15, %91 : vector<16x128xf32>
    %cst_42 = arith.constant dense<0.000000e+00> : vector<16xf32>
    %93 = vector.multi_reduction <add>, %92, %cst_42 [1] : vector<16x128xf32> to vector<16xf32>
    %94 = vector.shape_cast %93 : vector<16xf32> to vector<16x1xf32>
    %95 = arith.maximumf %74, %94 : vector<16x1xf32>
    %96 = arith.subf %74, %95 : vector<16x1xf32>
    %97 = math.exp %96 : vector<16x1xf32>
    %98 = arith.subf %94, %95 : vector<16x1xf32>
    %99 = math.exp %98 : vector<16x1xf32>
    %100 = arith.mulf %97, %80 : vector<16x1xf32>
    %101 = arith.addf %100, %99 : vector<16x1xf32>
    %102 = vector.broadcast %97 : vector<16x1xf32> to vector<16x128xf32>
    %103 = arith.mulf %102, %88 : vector<16x128xf32>
    %c4_43 = arith.constant 4 : index
    %c0_44 = arith.constant 0 : index
    %c0_45 = arith.constant 0 : index
    %104 = vector.load %arg8[%c4_43, %c0_44, %c0_45] : memref<8x16x128xbf16, #tpu.memory_space<vmem>>, vector<1x16x128xbf16>
    %105 = vector.shape_cast %104 : vector<1x16x128xbf16> to vector<16x128xbf16>
    %106 = arith.extf %105 : vector<16x128xbf16> to vector<16x128xf32>
    %107 = vector.broadcast %99 : vector<16x1xf32> to vector<16x128xf32>
    %108 = arith.mulf %107, %106 : vector<16x128xf32>
    %109 = arith.addf %103, %108 : vector<16x128xf32>
    %c5 = arith.constant 5 : index
    %c0_46 = arith.constant 0 : index
    %c0_47 = arith.constant 0 : index
    %110 = vector.load %arg7[%c5, %c0_46, %c0_47] : memref<8x16x128xbf16, #tpu.memory_space<vmem>>, vector<1x16x128xbf16>
    %111 = vector.shape_cast %110 : vector<1x16x128xbf16> to vector<16x128xbf16>
    %112 = arith.extf %111 : vector<16x128xbf16> to vector<16x128xf32>
    %113 = arith.mulf %15, %112 : vector<16x128xf32>
    %cst_48 = arith.constant dense<0.000000e+00> : vector<16xf32>
    %114 = vector.multi_reduction <add>, %113, %cst_48 [1] : vector<16x128xf32> to vector<16xf32>
    %115 = vector.shape_cast %114 : vector<16xf32> to vector<16x1xf32>
    %116 = arith.maximumf %95, %115 : vector<16x1xf32>
    %117 = arith.subf %95, %116 : vector<16x1xf32>
    %118 = math.exp %117 : vector<16x1xf32>
    %119 = arith.subf %115, %116 : vector<16x1xf32>
    %120 = math.exp %119 : vector<16x1xf32>
    %121 = arith.mulf %118, %101 : vector<16x1xf32>
    %122 = arith.addf %121, %120 : vector<16x1xf32>
    %123 = vector.broadcast %118 : vector<16x1xf32> to vector<16x128xf32>
    %124 = arith.mulf %123, %109 : vector<16x128xf32>
    %c5_49 = arith.constant 5 : index
    %c0_50 = arith.constant 0 : index
    %c0_51 = arith.constant 0 : index
    %125 = vector.load %arg8[%c5_49, %c0_50, %c0_51] : memref<8x16x128xbf16, #tpu.memory_space<vmem>>, vector<1x16x128xbf16>
    %126 = vector.shape_cast %125 : vector<1x16x128xbf16> to vector<16x128xbf16>
    %127 = arith.extf %126 : vector<16x128xbf16> to vector<16x128xf32>
    %128 = vector.broadcast %120 : vector<16x1xf32> to vector<16x128xf32>
    %129 = arith.mulf %128, %127 : vector<16x128xf32>
    %130 = arith.addf %124, %129 : vector<16x128xf32>
    %c6 = arith.constant 6 : index
    %c0_52 = arith.constant 0 : index
    %c0_53 = arith.constant 0 : index
    %131 = vector.load %arg7[%c6, %c0_52, %c0_53] : memref<8x16x128xbf16, #tpu.memory_space<vmem>>, vector<1x16x128xbf16>
    %132 = vector.shape_cast %131 : vector<1x16x128xbf16> to vector<16x128xbf16>
    %133 = arith.extf %132 : vector<16x128xbf16> to vector<16x128xf32>
    %134 = arith.mulf %15, %133 : vector<16x128xf32>
    %cst_54 = arith.constant dense<0.000000e+00> : vector<16xf32>
    %135 = vector.multi_reduction <add>, %134, %cst_54 [1] : vector<16x128xf32> to vector<16xf32>
    %136 = vector.shape_cast %135 : vector<16xf32> to vector<16x1xf32>
    %137 = arith.maximumf %116, %136 : vector<16x1xf32>
    %138 = arith.subf %116, %137 : vector<16x1xf32>
    %139 = math.exp %138 : vector<16x1xf32>
    %140 = arith.subf %136, %137 : vector<16x1xf32>
    %141 = math.exp %140 : vector<16x1xf32>
    %142 = arith.mulf %139, %122 : vector<16x1xf32>
    %143 = arith.addf %142, %141 : vector<16x1xf32>
    %144 = vector.broadcast %139 : vector<16x1xf32> to vector<16x128xf32>
    %145 = arith.mulf %144, %130 : vector<16x128xf32>
    %c6_55 = arith.constant 6 : index
    %c0_56 = arith.constant 0 : index
    %c0_57 = arith.constant 0 : index
    %146 = vector.load %arg8[%c6_55, %c0_56, %c0_57] : memref<8x16x128xbf16, #tpu.memory_space<vmem>>, vector<1x16x128xbf16>
    %147 = vector.shape_cast %146 : vector<1x16x128xbf16> to vector<16x128xbf16>
    %148 = arith.extf %147 : vector<16x128xbf16> to vector<16x128xf32>
    %149 = vector.broadcast %141 : vector<16x1xf32> to vector<16x128xf32>
    %150 = arith.mulf %149, %148 : vector<16x128xf32>
    %151 = arith.addf %145, %150 : vector<16x128xf32>
    %c7 = arith.constant 7 : index
    %c0_58 = arith.constant 0 : index
    %c0_59 = arith.constant 0 : index
    %152 = vector.load %arg7[%c7, %c0_58, %c0_59] : memref<8x16x128xbf16, #tpu.memory_space<vmem>>, vector<1x16x128xbf16>
    %153 = vector.shape_cast %152 : vector<1x16x128xbf16> to vector<16x128xbf16>
    %154 = arith.extf %153 : vector<16x128xbf16> to vector<16x128xf32>
    %155 = arith.mulf %15, %154 : vector<16x128xf32>
    %cst_60 = arith.constant dense<0.000000e+00> : vector<16xf32>
    %156 = vector.multi_reduction <add>, %155, %cst_60 [1] : vector<16x128xf32> to vector<16xf32>
    %157 = vector.shape_cast %156 : vector<16xf32> to vector<16x1xf32>
    %158 = arith.maximumf %137, %157 : vector<16x1xf32>
    %159 = arith.subf %137, %158 : vector<16x1xf32>
    %160 = math.exp %159 : vector<16x1xf32>
    %161 = arith.subf %157, %158 : vector<16x1xf32>
    %162 = math.exp %161 : vector<16x1xf32>
    %163 = arith.mulf %160, %143 : vector<16x1xf32>
    %164 = arith.addf %163, %162 : vector<16x1xf32>
    %165 = vector.broadcast %160 : vector<16x1xf32> to vector<16x128xf32>
    %166 = arith.mulf %165, %151 : vector<16x128xf32>
    %c7_61 = arith.constant 7 : index
    %c0_62 = arith.constant 0 : index
    %c0_63 = arith.constant 0 : index
    %167 = vector.load %arg8[%c7_61, %c0_62, %c0_63] : memref<8x16x128xbf16, #tpu.memory_space<vmem>>, vector<1x16x128xbf16>
    %168 = vector.shape_cast %167 : vector<1x16x128xbf16> to vector<16x128xbf16>
    %169 = arith.extf %168 : vector<16x128xbf16> to vector<16x128xf32>
    %170 = vector.broadcast %162 : vector<16x1xf32> to vector<16x128xf32>
    %171 = arith.mulf %170, %169 : vector<16x128xf32>
    %172 = arith.addf %166, %171 : vector<16x128xf32>
    %173 = tpu.reciprocal %164 {approx = true} : vector<16x1xf32> -> vector<16x1xf32>
    %174 = vector.broadcast %173 : vector<16x1xf32> to vector<16x128xf32>
    %175 = arith.mulf %172, %174 : vector<16x128xf32>
    %176 = arith.truncf %175 : vector<16x128xf32> to vector<16x128xbf16>
    %c0_64 = arith.constant 0 : index
    %c0_65 = arith.constant 0 : index
    %177 = vector.load %arg10[%c0_64, %c0_65] : memref<128x128xbf16, #tpu.memory_space<vmem>>, vector<128x128xbf16>
    %cst_66 = arith.constant dense<0.000000e+00> : vector<16x128xf32>
    %178 = tpu.matmul %176, %177, %cst_66 {dimension_numbers = #tpu.dot_dimension_numbers<[1], [0], [0], [1], [0, 0, 1, 1], [], []>} : vector<16x128xbf16>, vector<128x128xbf16>, vector<16x128xf32> -> vector<16x128xf32>
    %179 = arith.truncf %11 : vector<16x128xf32> to vector<16x128xbf16>
    %c0_67 = arith.constant 0 : index
    %c0_68 = arith.constant 0 : index
    %180 = vector.load %arg11[%c0_67, %c0_68] : memref<128x128xbf16, #tpu.memory_space<vmem>>, vector<128x128xbf16>
    %cst_69 = arith.constant dense<0.000000e+00> : vector<16x128xf32>
    %181 = tpu.matmul %179, %180, %cst_69 {dimension_numbers = #tpu.dot_dimension_numbers<[1], [0], [0], [1], [0, 0, 1, 1], [], []>} : vector<16x128xbf16>, vector<128x128xbf16>, vector<16x128xf32> -> vector<16x128xf32>
    %182 = arith.addf %178, %181 : vector<16x128xf32>
    %c0_70 = arith.constant 0 : index
    %c0_71 = arith.constant 0 : index
    %183 = vector.load %arg12[%c0_70, %c0_71] : memref<1x128xf32, #tpu.memory_space<vmem>>, vector<1x128xf32>
    %184 = vector.broadcast %183 : vector<1x128xf32> to vector<16x128xf32>
    %185 = arith.addf %182, %184 : vector<16x128xf32>
    %c0_72 = arith.constant 0 : index
    %c0_73 = arith.constant 0 : index
    %186 = vector.load %arg6[%c0_72, %c0_73] : memref<16x128xf32, #tpu.memory_space<vmem>>, vector<16x128xf32>
    %c0_74 = arith.constant 0 : index
    %c0_75 = arith.constant 0 : index
    %187 = vector.load %arg13[%c0_74, %c0_75] : memref<1x128xf32, #tpu.memory_space<vmem>>, vector<1x128xf32>
    %188 = vector.broadcast %187 : vector<1x128xf32> to vector<16x128xf32>
    %189 = arith.mulf %186, %188 : vector<16x128xf32>
    %cst_76 = arith.constant dense<0.000000e+00> : vector<16xf32>
    %190 = vector.multi_reduction <add>, %189, %cst_76 [1] : vector<16x128xf32> to vector<16xf32>
    %191 = vector.shape_cast %190 : vector<16xf32> to vector<16x1xf32>
    %c0_77 = arith.constant 0 : index
    %192 = memref.load %arg14[%c0_77] : memref<1xf32, #tpu.memory_space<smem>>
    %193 = vector.broadcast %192 : f32 to vector<16x1xf32>
    %194 = arith.addf %191, %193 : vector<16x1xf32>
    %195 = arith.negf %194 : vector<16x1xf32>
    %196 = math.exp %195 : vector<16x1xf32>
    %cst_78 = arith.constant 1.000000e+00 : f32
    %197 = vector.broadcast %cst_78 : f32 to vector<16x1xf32>
    %198 = arith.addf %197, %196 : vector<16x1xf32>
    %199 = arith.divf %197, %198 : vector<16x1xf32>
    %200 = vector.broadcast %199 : vector<16x1xf32> to vector<16x128xf32>
    %201 = arith.mulf %200, %0 : vector<16x128xf32>
    %cst_79 = arith.constant 1.000000e+00 : f32
    %202 = vector.broadcast %cst_79 : f32 to vector<16x1xf32>
    %203 = arith.subf %202, %199 : vector<16x1xf32>
    %204 = vector.broadcast %203 : vector<16x1xf32> to vector<16x128xf32>
    %205 = arith.mulf %204, %185 : vector<16x128xf32>
    %206 = arith.addf %201, %205 : vector<16x128xf32>
    %c0_80 = arith.constant 0 : index
    %c0_81 = arith.constant 0 : index
    %207 = vector.load %arg15[%c0_80, %c0_81] : memref<16x128xf32, #tpu.memory_space<vmem>>, vector<16x128xf32>
    tpu.vector_store %arg15[%c0_80, %c0_81], %206 {strides = array<i32>} : memref<16x128xf32, #tpu.memory_space<vmem>>, vector<16x128xf32>,
    return
  }
  func.func @transform_0(%arg0: i32) -> (i32, i32) {
    %c0_i32 = arith.constant 0 : i32
    %c0_i32_0 = arith.constant 0 : i32
    return %arg0, %c0_i32 : i32, i32
  }
  func.func @transform_1(%arg0: i32) -> (i32, i32) {
    %c0_i32 = arith.constant 0 : i32
    %c0_i32_0 = arith.constant 0 : i32
    return %arg0, %c0_i32 : i32, i32
  }
  func.func @transform_2(%arg0: i32) -> (i32, i32) {
    %c0_i32 = arith.constant 0 : i32
    %c0_i32_0 = arith.constant 0 : i32
    %c0_i32_1 = arith.constant 0 : i32
    return %c0_i32, %c0_i32_0 : i32, i32
  }
  func.func @transform_3(%arg0: i32) -> (i32, i32) {
    %c0_i32 = arith.constant 0 : i32
    %c0_i32_0 = arith.constant 0 : i32
    %c0_i32_1 = arith.constant 0 : i32
    return %c0_i32, %c0_i32_0 : i32, i32
  }
  func.func @transform_4(%arg0: i32) -> (i32, i32) {
    %c0_i32 = arith.constant 0 : i32
    %c0_i32_0 = arith.constant 0 : i32
    %c0_i32_1 = arith.constant 0 : i32
    return %c0_i32, %c0_i32_0 : i32, i32
  }
  func.func @transform_5(%arg0: i32) -> (i32, i32) {
    %c0_i32 = arith.constant 0 : i32
    %c0_i32_0 = arith.constant 0 : i32
    return %arg0, %c0_i32 : i32, i32
  }
  func.func @transform_6(%arg0: i32) -> (i32, i32, i32) {
    %c0_i32 = arith.constant 0 : i32
    %c0_i32_0 = arith.constant 0 : i32
    %c0_i32_1 = arith.constant 0 : i32
    return %c0_i32, %arg0, %c0_i32_0 : i32, i32, i32
  }
  func.func @transform_7(%arg0: i32) -> (i32, i32, i32) {
    %c0_i32 = arith.constant 0 : i32
    %c0_i32_0 = arith.constant 0 : i32
    %c0_i32_1 = arith.constant 0 : i32
    return %c0_i32, %arg0, %c0_i32_0 : i32, i32, i32
  }
  func.func @transform_8(%arg0: i32) -> (i32, i32) {
    %c0_i32 = arith.constant 0 : i32
    %c0_i32_0 = arith.constant 0 : i32
    %c0_i32_1 = arith.constant 0 : i32
    return %c0_i32, %c0_i32_0 : i32, i32
  }
  func.func @transform_9(%arg0: i32) -> (i32, i32) {
    %c0_i32 = arith.constant 0 : i32
    %c0_i32_0 = arith.constant 0 : i32
    %c0_i32_1 = arith.constant 0 : i32
    return %c0_i32, %c0_i32_0 : i32, i32
  }
  func.func @transform_10(%arg0: i32) -> (i32, i32) {
    %c0_i32 = arith.constant 0 : i32
    %c0_i32_0 = arith.constant 0 : i32
    %c0_i32_1 = arith.constant 0 : i32
    return %c0_i32, %c0_i32_0 : i32, i32
  }
  func.func @transform_11(%arg0: i32) -> (i32, i32) {
    %c0_i32 = arith.constant 0 : i32
    %c0_i32_0 = arith.constant 0 : i32
    %c0_i32_1 = arith.constant 0 : i32
    return %c0_i32, %c0_i32_0 : i32, i32
  }
  func.func @transform_12(%arg0: i32) -> (i32, i32) {
    %c0_i32 = arith.constant 0 : i32
    %c0_i32_0 = arith.constant 0 : i32
    %c0_i32_1 = arith.constant 0 : i32
    return %c0_i32, %c0_i32_0 : i32, i32
  }
  func.func @transform_13(%arg0: i32) -> i32 {
    %c0_i32 = arith.constant 0 : i32
    %c0_i32_0 = arith.constant 0 : i32
    return %c0_i32 : i32
  }
  func.func @transform_14(%arg0: i32) -> (i32, i32) {
    %c0_i32 = arith.constant 0 : i32
    %c0_i32_0 = arith.constant 0 : i32
    return %arg0, %c0_i32 : i32, i32
  }
}

</mosaic_0001>

<llo_original>
// kernel: tpu_custom_call.1
$region0: #{tpu_custom_call.1}
  #allocation0 [shape = 'u32[]', space=smem, size = 0x4, offset = 0x4, fixed_abs, tag = 'smem constant byte address 0x4 - core index']
  #allocation1 [shape = 'u32[144,128]{1,0:T(1,128)}', space=vmem, size = 0x12000, scoped, tag = 'internal scratch']
  #allocation2 [shape = 'f32[1]{0:T(128)S(6)}', space=smem, size = 0x200, scoped, tag = 'scoped memory for tpu_custom_call.1']
  %s0 = inlined_call_operand.hbm [shape: f32[16,128], index: 0, kind: input, shape index: {}]
  %s1 = inlined_call_operand.hbm [shape: f32[16,128], index: 1, kind: input, shape index: {}]
  %s2 = inlined_call_operand.hbm [shape: bf16[128,128], index: 2, kind: input, shape index: {}]
  %s3 = inlined_call_operand.hbm [shape: bf16[128,128], index: 3, kind: input, shape index: {}]
  %s4 = inlined_call_operand.vmem [shape: f32[1,128], index: 4, kind: input, shape index: {}]
  %s5 = inlined_call_operand.vmem [shape: f32[16,128], index: 5, kind: input, shape index: {}]
  %s6 = inlined_call_operand.hbm [shape: bf16[8,16,128], index: 6, kind: input, shape index: {}]
  %s7 = inlined_call_operand.hbm [shape: bf16[8,16,128], index: 7, kind: input, shape index: {}]
  %s8 = inlined_call_operand.vmem [shape: f32[1,128], index: 8, kind: input, shape index: {}]
  %s9 = inlined_call_operand.hbm [shape: bf16[128,128], index: 9, kind: input, shape index: {}]
  %s10 = inlined_call_operand.hbm [shape: bf16[128,128], index: 10, kind: input, shape index: {}]
  %s11 = inlined_call_operand.vmem [shape: f32[1,128], index: 11, kind: input, shape index: {}]
  %s12 = inlined_call_operand.vmem [shape: f32[1,128], index: 12, kind: input, shape index: {}]
  %s13 = inlined_call_operand.<no memory space> [shape: f32[1], index: 13, kind: input, shape index: {}]
  %s14 = inlined_call_operand.hbm [shape: f32[16,128], index: 14, kind: output, shape index: {}]
  %s15 = sld [smem:[#allocation0]]
  $region98: #{tpu_custom_call.1} parent=0
    _
  %s17 = ssub.s32 1, %s15
  %s18 = scalar_select 0, %s17, %s15
  %19 = sst [smem:[#allocation2]] %s13
  $region1: #{tpu_custom_call.1} parent=0
    #allocation3 [shape = 'u8[8192]{0}', space=vmem, size = 0x2000, scoped, tag = 'input window, operand 0, single buffered']
    #allocation4 [shape = 's32[1]{0}', space=sflag, size = 0x4, scoped, tag = 'scoped memory for tpu_custom_call.1']
    #allocation5 [shape = 's32[1]{0}', space=sflag, size = 0x4, scoped, tag = 'scoped memory for tpu_custom_call.1']
    #allocation6 [shape = 'u8[8192]{0}', space=vmem, size = 0x2000, scoped, tag = 'input window, operand 1, single buffered']
    #allocation7 [shape = 's32[1]{0}', space=sflag, size = 0x4, scoped, tag = 'scoped memory for tpu_custom_call.1']
    #allocation8 [shape = 'u8[32768]{0}', space=vmem, size = 0x8000, scoped, tag = 'input window, operand 2, single buffered']
    #allocation9 [shape = 'u8[32768]{0}', space=vmem, size = 0x8000, scoped, tag = 'input window, operand 3, single buffered']
    #allocation10 [shape = 's32[1]{0}', space=sflag, size = 0x4, scoped, tag = 'scoped memory for tpu_custom_call.1']
    #allocation11 [shape = 'u8[32768]{0}', space=vmem, size = 0x8000, scoped, tag = 'input window, operand 6, single buffered']
    #allocation12 [shape = 'u8[32768]{0}', space=vmem, size = 0x8000, scoped, tag = 'input window, operand 7, single buffered']
    #allocation13 [shape = 's32[1]{0}', space=sflag, size = 0x4, scoped, tag = 'scoped memory for tpu_custom_call.1']
    #allocation14 [shape = 'u8[32768]{0}', space=vmem, size = 0x8000, scoped, tag = 'input window, operand 9, single buffered']
    #allocation15 [shape = 'u8[32768]{0}', space=vmem, size = 0x8000, scoped, tag = 'input window, operand 10, single buffered']
    #allocation16 [shape = 's32[1]{0}', space=sflag, size = 0x4, scoped, tag = 'scoped memory for tpu_custom_call.1']
    #allocation17 [shape = 'u8[8192]{0}', space=vmem, size = 0x2000, scoped, tag = 'output window, operand 0, single buffered']
    %20 = vsyncpa [#allocation4], 0
    %21 = vsyncpa [#allocation7], 0
    %22 = vsyncpa [#allocation10], 0
    %23 = vsyncpa [#allocation13], 0
    %24 = vsyncpa [#allocation16], 0
    %25 = vsyncpa [#allocation5], 0
    // Predicated region
    $region2: #{tpu_custom_call.1} parent=1 // pred_check
      _
    $region3: #{tpu_custom_call.1} parent=1 // pred_check_branch
      %27 = sbr.rel (0) target = $region5
    $region4: #{tpu_custom_call.1} parent=1 // pred_region
      %s29 = ssub.s32 256, 256
      %30 = vsyncadd [#allocation4], %s29
      %s31 = sshll.u32 [#allocation3], 4
      %s32 = int_to_ptr.vmem [resolvable:$true] %s31
      %37 = dma.hbm_to_vmem [thread:$0]  %s0, 256, %s32, [#allocation4], 128, 128, 8
    $region5: #{tpu_custom_call.1} parent=1 // pred_fallthru
      _
    // Predicated region
    $region6: #{tpu_custom_call.1} parent=1 // pred_check
      _
    $region7: #{tpu_custom_call.1} parent=1 // pred_check_branch
      %39 = sbr.rel (0) target = $region9
    $region8: #{tpu_custom_call.1} parent=1 // pred_region
      %s41 = ssub.s32 256, 256
      %42 = vsyncadd [#allocation7], %s41
      %s43 = sshll.u32 [#allocation6], 4
      %s44 = int_to_ptr.vmem [resolvable:$true] %s43
      %49 = dma.hbm_to_vmem [thread:$0]  %s1, 256, %s44, [#allocation7], 128, 128, 8
    $region9: #{tpu_custom_call.1} parent=1 // pred_fallthru
      _
    // Predicated region
    $region10: #{tpu_custom_call.1} parent=1 // pred_check
      _
    $region11: #{tpu_custom_call.1} parent=1 // pred_check_branch
      %51 = sbr.rel (0) target = $region13
    $region12: #{tpu_custom_call.1} parent=1 // pred_region
      %s53 = ssub.s32 1024, 1024
      %54 = vsyncadd [#allocation7], %s53
      %s55 = sshll.u32 [#allocation8], 4
      %s56 = int_to_ptr.vmem [resolvable:$true] %s55
      %61 = dma.hbm_to_vmem [thread:$0]  %s2, 1024, %s56, [#allocation7], 64, 64, 4
    $region13: #{tpu_custom_call.1} parent=1 // pred_fallthru
      _
    // Predicated region
    $region14: #{tpu_custom_call.1} parent=1 // pred_check
      _
    $region15: #{tpu_custom_call.1} parent=1 // pred_check_branch
      %63 = sbr.rel (0) target = $region17
    $region16: #{tpu_custom_call.1} parent=1 // pred_region
      %s65 = ssub.s32 1024, 1024
      %66 = vsyncadd [#allocation10], %s65
      %s67 = sshll.u32 [#allocation9], 4
      %s68 = int_to_ptr.vmem [resolvable:$true] %s67
      %73 = dma.hbm_to_vmem [thread:$0]  %s3, 1024, %s68, [#allocation10], 64, 64, 4
    $region17: #{tpu_custom_call.1} parent=1 // pred_fallthru
      _
    // Predicated region
    $region18: #{tpu_custom_call.1} parent=1 // pred_check
      _
    $region19: #{tpu_custom_call.1} parent=1 // pred_check_branch
      %75 = sbr.rel (0) target = $region21
    $region20: #{tpu_custom_call.1} parent=1 // pred_region
      _
    $region21: #{tpu_custom_call.1} parent=1 // pred_fallthru
      _
    // Predicated region
    $region22: #{tpu_custom_call.1} parent=1 // pred_check
      _
    $region23: #{tpu_custom_call.1} parent=1 // pred_check_branch
      %77 = sbr.rel (0) target = $region25
    $region24: #{tpu_custom_call.1} parent=1 // pred_region
      _
    $region25: #{tpu_custom_call.1} parent=1 // pred_fallthru
      _
    // Predicated region
    $region26: #{tpu_custom_call.1} parent=1 // pred_check
      _
    $region27: #{tpu_custom_call.1} parent=1 // pred_check_branch
      %79 = sbr.rel (0) target = $region29
    $region28: #{tpu_custom_call.1} parent=1 // pred_region
      %s81 = ssub.s32 1024, 1024
      %82 = vsyncadd [#allocation10], %s81
      %s83 = sshll.u32 [#allocation11], 4
      %s84 = int_to_ptr.vmem [resolvable:$true] %s83
      %89 = dma.hbm_to_vmem [thread:$0]  %s6, 1024, %s84, [#allocation10], 64, 64, 4
    $region29: #{tpu_custom_call.1} parent=1 // pred_fallthru
      _
    // Predicated region
    $region30: #{tpu_custom_call.1} parent=1 // pred_check
      _
    $region31: #{tpu_custom_call.1} parent=1 // pred_check_branch
      %91 = sbr.rel (0) target = $region33
    $region32: #{tpu_custom_call.1} parent=1 // pred_region
      %s93 = ssub.s32 1024, 1024
      %94 = vsyncadd [#allocation13], %s93
      %s95 = sshll.u32 [#allocation12], 4
      %s96 = int_to_ptr.vmem [resolvable:$true] %s95
      %101 = dma.hbm_to_vmem [thread:$0]  %s7, 1024, %s96, [#allocation13], 64, 64, 4
    $region33: #{tpu_custom_call.1} parent=1 // pred_fallthru
      _
    // Predicated region
    $region34: #{tpu_custom_call.1} parent=1 // pred_check
      _
    $region35: #{tpu_custom_call.1} parent=1 // pred_check_branch
      %103 = sbr.rel (0) target = $region37
    $region36: #{tpu_custom_call.1} parent=1 // pred_region
      _
    $region37: #{tpu_custom_call.1} parent=1 // pred_fallthru
      _
    // Predicated region
    $region38: #{tpu_custom_call.1} parent=1 // pred_check
      _
    $region39: #{tpu_custom_call.1} parent=1 // pred_check_branch
      %105 = sbr.rel (0) target = $region41
    $region40: #{tpu_custom_call.1} parent=1 // pred_region
      %s107 = ssub.s32 1024, 1024
      %108 = vsyncadd [#allocation13], %s107
      %s109 = sshll.u32 [#allocation14], 4
      %s110 = int_to_ptr.vmem [resolvable:$true] %s109
      %115 = dma.hbm_to_vmem [thread:$0]  %s9, 1024, %s110, [#allocation13], 64, 64, 4
    $region41: #{tpu_custom_call.1} parent=1 // pred_fallthru
      _
    // Predicated region
    $region42: #{tpu_custom_call.1} parent=1 // pred_check
      _
    $region43: #{tpu_custom_call.1} parent=1 // pred_check_branch
      %117 = sbr.rel (0) target = $region45
    $region44: #{tpu_custom_call.1} parent=1 // pred_region
      %s119 = ssub.s32 1024, 1024
      %120 = vsyncadd [#allocation16], %s119
      %s121 = sshll.u32 [#allocation15], 4
      %s122 = int_to_ptr.vmem [resolvable:$true] %s121
      %127 = dma.hbm_to_vmem [thread:$0]  %s10, 1024, %s122, [#allocation16], 64, 64, 4
    $region45: #{tpu_custom_call.1} parent=1 // pred_fallthru
      _
    // Predicated region
    $region46: #{tpu_custom_call.1} parent=1 // pred_check
      _
    $region47: #{tpu_custom_call.1} parent=1 // pred_check_branch
      %129 = sbr.rel (0) target = $region49
    $region48: #{tpu_custom_call.1} parent=1 // pred_region
      _
    $region49: #{tpu_custom_call.1} parent=1 // pred_fallthru
      _
    // Predicated region
    $region50: #{tpu_custom_call.1} parent=1 // pred_check
      _
    $region51: #{tpu_custom_call.1} parent=1 // pred_check_branch
      %131 = sbr.rel (0) target = $region53
    $region52: #{tpu_custom_call.1} parent=1 // pred_region
      _
    $region53: #{tpu_custom_call.1} parent=1 // pred_fallthru
      _
    // Predicated region
    $region54: #{tpu_custom_call.1} parent=1 // pred_check
      _
    $region55: #{tpu_custom_call.1} parent=1 // pred_check_branch
      %133 = sbr.rel (0) target = $region57
    $region56: #{tpu_custom_call.1} parent=1 // pred_region
      _
    $region57: #{tpu_custom_call.1} parent=1 // pred_fallthru
      _
    // Predicated region
    $region58: #{tpu_custom_call.1} parent=1 // pred_check
      _
    $region59: #{tpu_custom_call.1} parent=1 // pred_check_branch
      %135 = sbr.rel (0) target = $region61
    $region60: #{tpu_custom_call.1} parent=1 // pred_region
      %136 = dma.done [#allocation4], 256
    $region61: #{tpu_custom_call.1} parent=1 // pred_fallthru
      _
    // Predicated region
    $region62: #{tpu_custom_call.1} parent=1 // pred_check
      _
    $region63: #{tpu_custom_call.1} parent=1 // pred_check_branch
      %138 = sbr.rel (0) target = $region65
    $region64: #{tpu_custom_call.1} parent=1 // pred_region
      %139 = dma.done [#allocation7], 256
    $region65: #{tpu_custom_call.1} parent=1 // pred_fallthru
      _
    // Predicated region
    $region66: #{tpu_custom_call.1} parent=1 // pred_check
      _
    $region67: #{tpu_custom_call.1} parent=1 // pred_check_branch
      %141 = sbr.rel (0) target = $region69
    $region68: #{tpu_custom_call.1} parent=1 // pred_region
      %142 = dma.done [#allocation7], 1024
    $region69: #{tpu_custom_call.1} parent=1 // pred_fallthru
      _
    // Predicated region
    $region70: #{tpu_custom_call.1} parent=1 // pred_check
      _
    $region71: #{tpu_custom_call.1} parent=1 // pred_check_branch
      %144 = sbr.rel (0) target = $region73
    $region72: #{tpu_custom_call.1} parent=1 // pred_region
      %145 = dma.done [#allocation10], 1024
    $region73: #{tpu_custom_call.1} parent=1 // pred_fallthru
      _
    // Predicated region
    $region74: #{tpu_custom_call.1} parent=1 // pred_check
      _
    $region75: #{tpu_custom_call.1} parent=1 // pred_check_branch
      %147 = sbr.rel (0) target = $region77
    $region76: #{tpu_custom_call.1} parent=1 // pred_region
      %148 = dma.done [#allocation10], 1024
    $region77: #{tpu_custom_call.1} parent=1 // pred_fallthru
      _
    // Predicated region
    $region78: #{tpu_custom_call.1} parent=1 // pred_check
      _
    $region79: #{tpu_custom_call.1} parent=1 // pred_check_branch
      %150 = sbr.rel (0) target = $region81
    $region80: #{tpu_custom_call.1} parent=1 // pred_region
      %151 = dma.done [#allocation13], 1024
    $region81: #{tpu_custom_call.1} parent=1 // pred_fallthru
      _
    // Predicated region
    $region82: #{tpu_custom_call.1} parent=1 // pred_check
      _
    $region83: #{tpu_custom_call.1} parent=1 // pred_check_branch
      %153 = sbr.rel (0) target = $region85
    $region84: #{tpu_custom_call.1} parent=1 // pred_region
      %154 = dma.done [#allocation13], 1024
    $region85: #{tpu_custom_call.1} parent=1 // pred_fallthru
      _
    // Predicated region
    $region86: #{tpu_custom_call.1} parent=1 // pred_check
      _
    $region87: #{tpu_custom_call.1} parent=1 // pred_check_branch
      %156 = sbr.rel (0) target = $region89
    $region88: #{tpu_custom_call.1} parent=1 // pred_region
      %157 = dma.done [#allocation16], 1024
    $region89: #{tpu_custom_call.1} parent=1 // pred_fallthru
      _
    %v159 = vld [vmem:[#allocation6] sm:$0xff]
    %v160 = vld [vmem:[#allocation6 + $0x8] sm:$0xff]
    %v161 = vld [vmem:[#allocation3] sm:$0xff]
    %v162 = vld [vmem:[#allocation3 + $0x8] sm:$0xff]
    %v163 = vpack.c.bf16 %v162, %v161
    %v164 = vld [vmem:[#allocation8] sm:$0xf]
    %v165 = vld [vmem:[#allocation8 + $0x4] sm:$0xf]
    %v166 = vld [vmem:[#allocation8 + $0x8] sm:$0xf]
    %v167 = vld [vmem:[#allocation8 + $0xc] sm:$0xf]
    %v168 = vld [vmem:[#allocation8 + $0x10] sm:$0xf]
    %v169 = vld [vmem:[#allocation8 + $0x14] sm:$0xf]
    %v170 = vld [vmem:[#allocation8 + $0x18] sm:$0xf]
    %v171 = vld [vmem:[#allocation8 + $0x1c] sm:$0xf]
    %v172 = vld [vmem:[#allocation8 + $0x20] sm:$0xf]
    %v173 = vld [vmem:[#allocation8 + $0x24] sm:$0xf]
    %v174 = vld [vmem:[#allocation8 + $0x28] sm:$0xf]
    %v175 = vld [vmem:[#allocation8 + $0x2c] sm:$0xf]
    %v176 = vld [vmem:[#allocation8 + $0x30] sm:$0xf]
    %v177 = vld [vmem:[#allocation8 + $0x34] sm:$0xf]
    %v178 = vld [vmem:[#allocation8 + $0x38] sm:$0xf]
    %v179 = vld [vmem:[#allocation8 + $0x3c] sm:$0xf]
    %v180 = vpack.c.bf16 %v160, %v159
    %v181 = vld [vmem:[#allocation9] sm:$0xf]
    %v182 = vld [vmem:[#allocation9 + $0x4] sm:$0xf]
    %v183 = vld [vmem:[#allocation9 + $0x8] sm:$0xf]
    %v184 = vld [vmem:[#allocation9 + $0xc] sm:$0xf]
    %v185 = vld [vmem:[#allocation9 + $0x10] sm:$0xf]
    %v186 = vld [vmem:[#allocation9 + $0x14] sm:$0xf]
    %v187 = vld [vmem:[#allocation9 + $0x18] sm:$0xf]
    %v188 = vld [vmem:[#allocation9 + $0x1c] sm:$0xf]
    %v189 = vld [vmem:[#allocation9 + $0x20] sm:$0xf]
    %v190 = vld [vmem:[#allocation9 + $0x24] sm:$0xf]
    %v191 = vld [vmem:[#allocation9 + $0x28] sm:$0xf]
    %v192 = vld [vmem:[#allocation9 + $0x2c] sm:$0xf]
    %v193 = vld [vmem:[#allocation9 + $0x30] sm:$0xf]
    %v194 = vld [vmem:[#allocation9 + $0x34] sm:$0xf]
    %v195 = vld [vmem:[#allocation9 + $0x38] sm:$0xf]
    %v196 = vld [vmem:[#allocation9 + $0x3c] sm:$0xf]
    %v213 = vunpack.c.l.b16 %v181
    %v214 = vunpack.c.l.b16 %v182
    %v215 = vunpack.c.l.b16 %v183
    %v216 = vunpack.c.l.b16 %v184
    %v217 = vunpack.c.l.b16 %v185
    %v218 = vunpack.c.l.b16 %v186
    %v219 = vunpack.c.l.b16 %v187
    %v220 = vunpack.c.l.b16 %v188
    %v221 = vunpack.c.l.b16 %v189
    %v222 = vunpack.c.l.b16 %v190
    %v223 = vunpack.c.l.b16 %v191
    %v224 = vunpack.c.l.b16 %v192
    %v225 = vunpack.c.l.b16 %v193
    %v226 = vunpack.c.l.b16 %v194
    %v227 = vunpack.c.l.b16 %v195
    %v228 = vunpack.c.l.b16 %v196
    %v229 = vpack.c.b16 %v214, %v213
    %v230 = vpack.c.b16 %v216, %v215
    %v231 = vpack.c.b16 %v218, %v217
    %v232 = vpack.c.b16 %v220, %v219
    %v233 = vpack.c.b16 %v222, %v221
    %v234 = vpack.c.b16 %v224, %v223
    %v235 = vpack.c.b16 %v226, %v225
    %v236 = vpack.c.b16 %v228, %v227
    %245 = vmatprep.subr.bf16.mxu0 0
    %246 = vmatpush1.bf16.msra.mxu0 %v229
    %247 = vmatprep.subr.bf16.mxu0 0
    %248 = vmatpush1.bf16.msra.mxu0 %v230
    %249 = vmatprep.subr.bf16.mxu0 0
    %250 = vmatpush1.bf16.msra.mxu0 %v231
    %251 = vmatprep.subr.bf16.mxu0 0
    %252 = vmatpush1.bf16.msra.mxu0 %v232
    %253 = vmatprep.subr.bf16.mxu0 0
    %254 = vmatpush1.bf16.msra.mxu0 %v233
    %255 = vmatprep.subr.bf16.mxu0 0
    %256 = vmatpush1.bf16.msra.mxu0 %v234
    %257 = vmatprep.subr.bf16.mxu0 0
    %258 = vmatpush1.bf16.msra.mxu0 %v235
    %259 = vmatprep.subr.bf16.mxu0 0
    %260 = vmatpush1.bf16.msra.mxu0 %v236
    %261 = vmatprep.subr.bf16.mxu0 0
    %262 = vmatpush1.bf16.msra.mxu0 0
    %263 = vmatprep.subr.bf16.mxu0 0
    %264 = vmatpush1.bf16.msra.mxu0 0
    %265 = vmatprep.subr.bf16.mxu0 0
    %266 = vmatpush1.bf16.msra.mxu0 0
    %267 = vmatprep.subr.bf16.mxu0 0
    %268 = vmatpush1.bf16.msra.mxu0 0
    %269 = vmatprep.subr.bf16.mxu0 0
    %270 = vmatpush1.bf16.msra.mxu0 0
    %271 = vmatprep.subr.bf16.mxu0 0
    %272 = vmatpush1.bf16.msra.mxu0 0
    %273 = vmatprep.subr.bf16.mxu0 0
    %274 = vmatpush1.bf16.msra.mxu0 0
    %275 = vmatprep.subr.bf16.mxu0 0
    %276 = vmatpush1.bf16.msra.mxu0 0
    %277 = vmatprep.mubr.bf16.mxu0 0
    %278 = vmatmul.mubr.bf16.gmra.mrb[0].mxu0 %v180
    %v279 = vpop.f32.mrb[0].mxu0
    %v280 = vadd.f32 0.0, %v279
    %v281 = vpop.f32.mrb[0].mxu0
    %v282 = vpop.f32.mrb[0].mxu0
    %v283 = vadd.f32 0.0, %v282
    %v284 = vpop.f32.mrb[0].mxu0
    %285 = vdwg.mxu0
    %v302 = vunpack.c.l.b16 %v164
    %v303 = vunpack.c.l.b16 %v165
    %v304 = vunpack.c.l.b16 %v166
    %v305 = vunpack.c.l.b16 %v167
    %v306 = vunpack.c.l.b16 %v168
    %v307 = vunpack.c.l.b16 %v169
    %v308 = vunpack.c.l.b16 %v170
    %v309 = vunpack.c.l.b16 %v171
    %v310 = vunpack.c.l.b16 %v172
    %v311 = vunpack.c.l.b16 %v173
    %v312 = vunpack.c.l.b16 %v174
    %v313 = vunpack.c.l.b16 %v175
    %v314 = vunpack.c.l.b16 %v176
    %v315 = vunpack.c.l.b16 %v177
    %v316 = vunpack.c.l.b16 %v178
    %v317 = vunpack.c.l.b16 %v179
    %v318 = vpack.c.b16 %v303, %v302
    %v319 = vpack.c.b16 %v305, %v304
    %v320 = vpack.c.b16 %v307, %v306
    %v321 = vpack.c.b16 %v309, %v308
    %v322 = vpack.c.b16 %v311, %v310
    %v323 = vpack.c.b16 %v313, %v312
    %v324 = vpack.c.b16 %v315, %v314
    %v325 = vpack.c.b16 %v317, %v316
    %334 = vmatprep.subr.bf16.mxu0 0
    %335 = vmatpush1.bf16.msra.mxu0 %v318
    %336 = vmatprep.subr.bf16.mxu0 0
    %337 = vmatpush1.bf16.msra.mxu0 %v319
    %338 = vmatprep.subr.bf16.mxu0 0
    %339 = vmatpush1.bf16.msra.mxu0 %v320
    %340 = vmatprep.subr.bf16.mxu0 0
    %341 = vmatpush1.bf16.msra.mxu0 %v321
    %342 = vmatprep.subr.bf16.mxu0 0
    %343 = vmatpush1.bf16.msra.mxu0 %v322
    %344 = vmatprep.subr.bf16.mxu0 0
    %345 = vmatpush1.bf16.msra.mxu0 %v323
    %346 = vmatprep.subr.bf16.mxu0 0
    %347 = vmatpush1.bf16.msra.mxu0 %v324
    %348 = vmatprep.subr.bf16.mxu0 0
    %349 = vmatpush1.bf16.msra.mxu0 %v325
    %350 = vmatprep.subr.bf16.mxu0 0
    %351 = vmatpush1.bf16.msra.mxu0 0
    %352 = vmatprep.subr.bf16.mxu0 0
    %353 = vmatpush1.bf16.msra.mxu0 0
    %354 = vmatprep.subr.bf16.mxu0 0
    %355 = vmatpush1.bf16.msra.mxu0 0
    %356 = vmatprep.subr.bf16.mxu0 0
    %357 = vmatpush1.bf16.msra.mxu0 0
    %358 = vmatprep.subr.bf16.mxu0 0
    %359 = vmatpush1.bf16.msra.mxu0 0
    %360 = vmatprep.subr.bf16.mxu0 0
    %361 = vmatpush1.bf16.msra.mxu0 0
    %362 = vmatprep.subr.bf16.mxu0 0
    %363 = vmatpush1.bf16.msra.mxu0 0
    %364 = vmatprep.subr.bf16.mxu0 0
    %365 = vmatpush1.bf16.msra.mxu0 0
    %366 = vmatprep.mubr.bf16.mxu0 0
    %367 = vmatmul.mubr.bf16.gmra.mrb[0].mxu0 %v163
    %v368 = vpop.f32.mrb[0].mxu0
    %v369 = vadd.f32 %v280, %v368
    %v370 = vpop.f32.mrb[0].mxu0
    %v371 = vpop.f32.mrb[0].mxu0
    %v372 = vadd.f32 %v283, %v371
    %v373 = vpop.f32.mrb[0].mxu0
    %374 = vdwg.mxu0
    %v375 = vld [vmem:[%s4] sm:$0x1]
    %v377 = vlaneseq
    %v378 = vshrl.u32 %v377, 7
    %v379 = vsub.s32 0, %v378
    %v380 = vrot.slane %v375, %v379
    %v382 = vadd.f32 %v369, %v380
    %v383 = vadd.f32 %v372, %v380
    %v384 = vld [vmem:[%s5] sm:$0xff]
    %v385 = vld [vmem:[%s5 + $0x8] sm:$0xff]
    %v386 = vld [vmem:[%s8] sm:$0x1]
    %v388 = vlaneseq
    %v389 = vshrl.u32 %v388, 7
    %v390 = vsub.s32 0, %v389
    %v391 = vrot.slane %v386, %v390
    %v393 = vmul.f32 %v384, %v391
    %v394 = vmul.f32 %v385, %v391
    %v395 = vld [vmem:[#allocation11] sm:$0xf]
    %v396 = vld [vmem:[#allocation11 + $0x4] sm:$0xf]
    %v397 = vunpack.c.l.bf16 %v395
    %v398 = vunpack.c.l.bf16 %v396
    %v399 = vmul.f32 %v393, %v397
    %v400 = vmul.f32 %v394, %v398
    %401 = vadd.xlane.f32.xlu0 %v399
    %v402 = vpop.xlane.xlu0 %401
    %403 = vadd.xlane.f32.xlu0 %v400
    %v404 = vpop.xlane.xlu0 %403
    %v405 = vld [vmem:[#allocation12] sm:$0xf]
    %v406 = vld [vmem:[#allocation12 + $0x4] sm:$0xf]
    %v407 = vunpack.c.l.bf16 %v405
    %v408 = vunpack.c.l.bf16 %v406
    %s409 = scalar_lea.vmem [#allocation11], 8
    %v410 = vld [vmem:[%s409] sm:$0xf]
    %v411 = vld [vmem:[%s409 + $0x4] sm:$0xf]
    %v412 = vunpack.c.l.bf16 %v410
    %v413 = vunpack.c.l.bf16 %v411
    %v414 = vmul.f32 %v393, %v412
    %v415 = vmul.f32 %v394, %v413
    %416 = vadd.xlane.f32.xlu0 %v414
    %v417 = vpop.xlane.xlu0 %416
    %418 = vadd.xlane.f32.xlu0 %v415
    %v419 = vpop.xlane.xlu0 %418
    %v420 = vmax.f32 %v402, %v417
    %v421 = vmax.f32 %v404, %v419
    %v422 = vsub.f32 %v402, %v420
    %v423 = vsub.f32 %v404, %v421
    %v424 = vmul.f32 %v422, 1.442695
    %v425 = vpow.pop %v424
    %v426 = vmul.f32 %v423, 1.442695
    %v427 = vpow.pop %v426
    %v428 = vsub.f32 %v417, %v420
    %v429 = vsub.f32 %v419, %v421
    %v430 = vmul.f32 %v428, 1.442695
    %v431 = vpow.pop %v430
    %v432 = vmul.f32 %v429, 1.442695
    %v433 = vpow.pop %v432
    %v434 = vadd.f32 %v425, %v431
    %v435 = vadd.f32 %v427, %v433
    %v436 = vmul.f32 %v425, %v407
    %v437 = vmul.f32 %v427, %v408
    %s438 = scalar_lea.vmem [#allocation12], 8
    %v439 = vld [vmem:[%s438] sm:$0xf]
    %v440 = vld [vmem:[%s438 + $0x4] sm:$0xf]
    %v441 = vunpack.c.l.bf16 %v439
    %v442 = vunpack.c.l.bf16 %v440
    %v443 = vmul.f32 %v431, %v441
    %v444 = vmul.f32 %v433, %v442
    %v445 = vadd.f32 %v436, %v443
    %v446 = vadd.f32 %v437, %v444
    %s447 = scalar_lea.vmem [#allocation11], 16
    %v448 = vld [vmem:[%s447] sm:$0xf]
    %v449 = vld [vmem:[%s447 + $0x4] sm:$0xf]
    %v450 = vunpack.c.l.bf16 %v448
    %v451 = vunpack.c.l.bf16 %v449
    %v452 = vmul.f32 %v393, %v450
    %v453 = vmul.f32 %v394, %v451
    %454 = vadd.xlane.f32.xlu0 %v452
    %v455 = vpop.xlane.xlu0 %454
    %456 = vadd.xlane.f32.xlu0 %v453
    %v457 = vpop.xlane.xlu0 %456
    %v458 = vmax.f32 %v420, %v455
    %v459 = vmax.f32 %v421, %v457
    %v460 = vsub.f32 %v420, %v458
    %v461 = vsub.f32 %v421, %v459
    %v462 = vmul.f32 %v460, 1.442695
    %v463 = vpow.pop %v462
    %v464 = vmul.f32 %v461, 1.442695
    %v465 = vpow.pop %v464
    %v466 = vsub.f32 %v455, %v458
    %v467 = vsub.f32 %v457, %v459
    %v468 = vmul.f32 %v466, 1.442695
    %v469 = vpow.pop %v468
    %v470 = vmul.f32 %v467, 1.442695
    %v471 = vpow.pop %v470
    %v472 = vmul.f32 %v463, %v434
    %v473 = vmul.f32 %v465, %v435
    %v474 = vadd.f32 %v472, %v469
    %v475 = vadd.f32 %v473, %v471
    %v476 = vmul.f32 %v463, %v445
    %v477 = vmul.f32 %v465, %v446
    %s478 = scalar_lea.vmem [#allocation12], 16
    %v479 = vld [vmem:[%s478] sm:$0xf]
    %v480 = vld [vmem:[%s478 + $0x4] sm:$0xf]
    %v481 = vunpack.c.l.bf16 %v479
    %v482 = vunpack.c.l.bf16 %v480
    %v483 = vmul.f32 %v469, %v481
    %v484 = vmul.f32 %v471, %v482
    %v485 = vadd.f32 %v476, %v483
    %v486 = vadd.f32 %v477, %v484
    %s487 = scalar_lea.vmem [#allocation11], 24
    %v488 = vld [vmem:[%s487] sm:$0xf]
    %v489 = vld [vmem:[%s487 + $0x4] sm:$0xf]
    %v490 = vunpack.c.l.bf16 %v488
    %v491 = vunpack.c.l.bf16 %v489
    %v492 = vmul.f32 %v393, %v490
    %v493 = vmul.f32 %v394, %v491
    %494 = vadd.xlane.f32.xlu0 %v492
    %v495 = vpop.xlane.xlu0 %494
    %496 = vadd.xlane.f32.xlu0 %v493
    %v497 = vpop.xlane.xlu0 %496
    %v498 = vmax.f32 %v458, %v495
    %v499 = vmax.f32 %v459, %v497
    %v500 = vsub.f32 %v458, %v498
    %v501 = vsub.f32 %v459, %v499
    %v502 = vmul.f32 %v500, 1.442695
    %v503 = vpow.pop %v502
    %v504 = vmul.f32 %v501, 1.442695
    %v505 = vpow.pop %v504
    %v506 = vsub.f32 %v495, %v498
    %v507 = vsub.f32 %v497, %v499
    %v508 = vmul.f32 %v506, 1.442695
    %v509 = vpow.pop %v508
    %v510 = vmul.f32 %v507, 1.442695
    %v511 = vpow.pop %v510
    %v512 = vmul.f32 %v503, %v474
    %v513 = vmul.f32 %v505, %v475
    %v514 = vadd.f32 %v512, %v509
    %v515 = vadd.f32 %v513, %v511
    %v516 = vmul.f32 %v503, %v485
    %v517 = vmul.f32 %v505, %v486
    %s518 = scalar_lea.vmem [#allocation12], 24
    %v519 = vld [vmem:[%s518] sm:$0xf]
    %v520 = vld [vmem:[%s518 + $0x4] sm:$0xf]
    %v521 = vunpack.c.l.bf16 %v519
    %v522 = vunpack.c.l.bf16 %v520
    %v523 = vmul.f32 %v509, %v521
    %v524 = vmul.f32 %v511, %v522
    %v525 = vadd.f32 %v516, %v523
    %v526 = vadd.f32 %v517, %v524
    %s527 = scalar_lea.vmem [#allocation11], 32
    %v528 = vld [vmem:[%s527] sm:$0xf]
    %v529 = vld [vmem:[%s527 + $0x4] sm:$0xf]
    %v530 = vunpack.c.l.bf16 %v528
    %v531 = vunpack.c.l.bf16 %v529
    %v532 = vmul.f32 %v393, %v530
    %v533 = vmul.f32 %v394, %v531
    %534 = vadd.xlane.f32.xlu0 %v532
    %v535 = vpop.xlane.xlu0 %534
    %536 = vadd.xlane.f32.xlu0 %v533
    %v537 = vpop.xlane.xlu0 %536
    %v538 = vmax.f32 %v498, %v535
    %v539 = vmax.f32 %v499, %v537
    %v540 = vsub.f32 %v498, %v538
    %v541 = vsub.f32 %v499, %v539
    %v542 = vmul.f32 %v540, 1.442695
    %v543 = vpow.pop %v542
    %v544 = vmul.f32 %v541, 1.442695
    %v545 = vpow.pop %v544
    %v546 = vsub.f32 %v535, %v538
    %v547 = vsub.f32 %v537, %v539
    %v548 = vmul.f32 %v546, 1.442695
    %v549 = vpow.pop %v548
    %v550 = vmul.f32 %v547, 1.442695
    %v551 = vpow.pop %v550
    %v552 = vmul.f32 %v543, %v514
    %v553 = vmul.f32 %v545, %v515
    %v554 = vadd.f32 %v552, %v549
    %v555 = vadd.f32 %v553, %v551
    %v556 = vmul.f32 %v543, %v525
    %v557 = vmul.f32 %v545, %v526
    %s558 = scalar_lea.vmem [#allocation12], 32
    %v559 = vld [vmem:[%s558] sm:$0xf]
    %v560 = vld [vmem:[%s558 + $0x4] sm:$0xf]
    %v561 = vunpack.c.l.bf16 %v559
    %v562 = vunpack.c.l.bf16 %v560
    %v563 = vmul.f32 %v549, %v561
    %v564 = vmul.f32 %v551, %v562
    %v565 = vadd.f32 %v556, %v563
    %v566 = vadd.f32 %v557, %v564
    %s567 = scalar_lea.vmem [#allocation11], 40
    %v568 = vld [vmem:[%s567] sm:$0xf]
    %v569 = vld [vmem:[%s567 + $0x4] sm:$0xf]
    %v570 = vunpack.c.l.bf16 %v568
    %v571 = vunpack.c.l.bf16 %v569
    %v572 = vmul.f32 %v393, %v570
    %v573 = vmul.f32 %v394, %v571
    %574 = vadd.xlane.f32.xlu0 %v572
    %v575 = vpop.xlane.xlu0 %574
    %576 = vadd.xlane.f32.xlu0 %v573
    %v577 = vpop.xlane.xlu0 %576
    %v578 = vmax.f32 %v538, %v575
    %v579 = vmax.f32 %v539, %v577
    %v580 = vsub.f32 %v538, %v578
    %v581 = vsub.f32 %v539, %v579
    %v582 = vmul.f32 %v580, 1.442695
    %v583 = vpow.pop %v582
    %v584 = vmul.f32 %v581, 1.442695
    %v585 = vpow.pop %v584
    %v586 = vsub.f32 %v575, %v578
    %v587 = vsub.f32 %v577, %v579
    %v588 = vmul.f32 %v586, 1.442695
    %v589 = vpow.pop %v588
    %v590 = vmul.f32 %v587, 1.442695
    %v591 = vpow.pop %v590
    %v592 = vmul.f32 %v583, %v554
    %v593 = vmul.f32 %v585, %v555
    %v594 = vadd.f32 %v592, %v589
    %v595 = vadd.f32 %v593, %v591
    %v596 = vmul.f32 %v583, %v565
    %v597 = vmul.f32 %v585, %v566
    %s598 = scalar_lea.vmem [#allocation12], 40
    %v599 = vld [vmem:[%s598] sm:$0xf]
    %v600 = vld [vmem:[%s598 + $0x4] sm:$0xf]
    %v601 = vunpack.c.l.bf16 %v599
    %v602 = vunpack.c.l.bf16 %v600
    %v603 = vmul.f32 %v589, %v601
    %v604 = vmul.f32 %v591, %v602
    %v605 = vadd.f32 %v596, %v603
    %v606 = vadd.f32 %v597, %v604
    %s607 = scalar_lea.vmem [#allocation11], 48
    %v608 = vld [vmem:[%s607] sm:$0xf]
    %v609 = vld [vmem:[%s607 + $0x4] sm:$0xf]
    %v610 = vunpack.c.l.bf16 %v608
    %v611 = vunpack.c.l.bf16 %v609
    %v612 = vmul.f32 %v393, %v610
    %v613 = vmul.f32 %v394, %v611
    %614 = vadd.xlane.f32.xlu0 %v612
    %v615 = vpop.xlane.xlu0 %614
    %616 = vadd.xlane.f32.xlu0 %v613
    %v617 = vpop.xlane.xlu0 %616
    %v618 = vmax.f32 %v578, %v615
    %v619 = vmax.f32 %v579, %v617
    %v620 = vsub.f32 %v578, %v618
    %v621 = vsub.f32 %v579, %v619
    %v622 = vmul.f32 %v620, 1.442695
    %v623 = vpow.pop %v622
    %v624 = vmul.f32 %v621, 1.442695
    %v625 = vpow.pop %v624
    %v626 = vsub.f32 %v615, %v618
    %v627 = vsub.f32 %v617, %v619
    %v628 = vmul.f32 %v626, 1.442695
    %v629 = vpow.pop %v628
    %v630 = vmul.f32 %v627, 1.442695
    %v631 = vpow.pop %v630
    %v632 = vmul.f32 %v623, %v594
    %v633 = vmul.f32 %v625, %v595
    %v634 = vadd.f32 %v632, %v629
    %v635 = vadd.f32 %v633, %v631
    %v636 = vmul.f32 %v623, %v605
    %v637 = vmul.f32 %v625, %v606
    %s638 = scalar_lea.vmem [#allocation12], 48
    %v639 = vld [vmem:[%s638] sm:$0xf]
    %v640 = vld [vmem:[%s638 + $0x4] sm:$0xf]
    %v641 = vunpack.c.l.bf16 %v639
    %v642 = vunpack.c.l.bf16 %v640
    %v643 = vmul.f32 %v629, %v641
    %v644 = vmul.f32 %v631, %v642
    %v645 = vadd.f32 %v636, %v643
    %v646 = vadd.f32 %v637, %v644
    %s647 = scalar_lea.vmem [#allocation11], 56
    %v648 = vld [vmem:[%s647] sm:$0xf]
    %v649 = vld [vmem:[%s647 + $0x4] sm:$0xf]
    %v650 = vunpack.c.l.bf16 %v648
    %v651 = vunpack.c.l.bf16 %v649
    %v652 = vmul.f32 %v393, %v650
    %v653 = vmul.f32 %v394, %v651
    %654 = vadd.xlane.f32.xlu0 %v652
    %v655 = vpop.xlane.xlu0 %654
    %656 = vadd.xlane.f32.xlu0 %v653
    %v657 = vpop.xlane.xlu0 %656
    %v658 = vmax.f32 %v618, %v655
    %v659 = vmax.f32 %v619, %v657
    %v660 = vsub.f32 %v618, %v658
    %v661 = vsub.f32 %v619, %v659
    %v662 = vmul.f32 %v660, 1.442695
    %v663 = vpow.pop %v662
    %v664 = vmul.f32 %v661, 1.442695
    %v665 = vpow.pop %v664
    %v666 = vsub.f32 %v655, %v658
    %v667 = vsub.f32 %v657, %v659
    %v668 = vmul.f32 %v666, 1.442695
    %v669 = vpow.pop %v668
    %v670 = vmul.f32 %v667, 1.442695
    %v671 = vpow.pop %v670
    %v672 = vmul.f32 %v663, %v634
    %v673 = vmul.f32 %v665, %v635
    %v674 = vadd.f32 %v672, %v669
    %v675 = vadd.f32 %v673, %v671
    %v676 = vmul.f32 %v663, %v645
    %v677 = vmul.f32 %v665, %v646
    %s678 = scalar_lea.vmem [#allocation12], 56
    %v679 = vld [vmem:[%s678] sm:$0xf]
    %v680 = vld [vmem:[%s678 + $0x4] sm:$0xf]
    %v681 = vunpack.c.l.bf16 %v679
    %v682 = vunpack.c.l.bf16 %v680
    %v683 = vmul.f32 %v669, %v681
    %v684 = vmul.f32 %v671, %v682
    %v685 = vadd.f32 %v676, %v683
    %v686 = vadd.f32 %v677, %v684
    %v687 = vrcp.pop %v674
    %v688 = vrcp.pop %v675
    %v689 = vmul.f32 %v685, %v687
    %v690 = vmul.f32 %v686, %v688
    %v691 = vpack.c.bf16 %v690, %v689
    %v692 = vld [vmem:[#allocation14] sm:$0xf]
    %v693 = vld [vmem:[#allocation14 + $0x4] sm:$0xf]
    %v694 = vld [vmem:[#allocation14 + $0x8] sm:$0xf]
    %v695 = vld [vmem:[#allocation14 + $0xc] sm:$0xf]
    %v696 = vld [vmem:[#allocation14 + $0x10] sm:$0xf]
    %v697 = vld [vmem:[#allocation14 + $0x14] sm:$0xf]
    %v698 = vld [vmem:[#allocation14 + $0x18] sm:$0xf]
    %v699 = vld [vmem:[#allocation14 + $0x1c] sm:$0xf]
    %v700 = vld [vmem:[#allocation14 + $0x20] sm:$0xf]
    %v701 = vld [vmem:[#allocation14 + $0x24] sm:$0xf]
    %v702 = vld [vmem:[#allocation14 + $0x28] sm:$0xf]
    %v703 = vld [vmem:[#allocation14 + $0x2c] sm:$0xf]
    %v704 = vld [vmem:[#allocation14 + $0x30] sm:$0xf]
    %v705 = vld [vmem:[#allocation14 + $0x34] sm:$0xf]
    %v706 = vld [vmem:[#allocation14 + $0x38] sm:$0xf]
    %v707 = vld [vmem:[#allocation14 + $0x3c] sm:$0xf]
    %v708 = vpack.c.bf16 %v383, %v382
    %v709 = vld [vmem:[#allocation15] sm:$0xf]
    %v710 = vld [vmem:[#allocation15 + $0x4] sm:$0xf]
    %v711 = vld [vmem:[#allocation15 + $0x8] sm:$0xf]
    %v712 = vld [vmem:[#allocation15 + $0xc] sm:$0xf]
    %v713 = vld [vmem:[#allocation15 + $0x10] sm:$0xf]
    %v714 = vld [vmem:[#allocation15 + $0x14] sm:$0xf]
    %v715 = vld [vmem:[#allocation15 + $0x18] sm:$0xf]
    %v716 = vld [vmem:[#allocation15 + $0x1c] sm:$0xf]
    %v717 = vld [vmem:[#allocation15 + $0x20] sm:$0xf]
    %v718 = vld [vmem:[#allocation15 + $0x24] sm:$0xf]
    %v719 = vld [vmem:[#allocation15 + $0x28] sm:$0xf]
    %v720 = vld [vmem:[#allocation15 + $0x2c] sm:$0xf]
    %v721 = vld [vmem:[#allocation15 + $0x30] sm:$0xf]
    %v722 = vld [vmem:[#allocation15 + $0x34] sm:$0xf]
    %v723 = vld [vmem:[#allocation15 + $0x38] sm:$0xf]
    %v724 = vld [vmem:[#allocation15 + $0x3c] sm:$0xf]
    %v741 = vunpack.c.l.b16 %v709
    %v742 = vunpack.c.l.b16 %v710
    %v743 = vunpack.c.l.b16 %v711
    %v744 = vunpack.c.l.b16 %v712
    %v745 = vunpack.c.l.b16 %v713
    %v746 = vunpack.c.l.b16 %v714
    %v747 = vunpack.c.l.b16 %v715
    %v748 = vunpack.c.l.b16 %v716
    %v749 = vunpack.c.l.b16 %v717
    %v750 = vunpack.c.l.b16 %v718
    %v751 = vunpack.c.l.b16 %v719
    %v752 = vunpack.c.l.b16 %v720
    %v753 = vunpack.c.l.b16 %v721
    %v754 = vunpack.c.l.b16 %v722
    %v755 = vunpack.c.l.b16 %v723
    %v756 = vunpack.c.l.b16 %v724
    %v757 = vpack.c.b16 %v742, %v741
    %v758 = vpack.c.b16 %v744, %v743
    %v759 = vpack.c.b16 %v746, %v745
    %v760 = vpack.c.b16 %v748, %v747
    %v761 = vpack.c.b16 %v750, %v749
    %v762 = vpack.c.b16 %v752, %v751
    %v763 = vpack.c.b16 %v754, %v753
    %v764 = vpack.c.b16 %v756, %v755
    %773 = vmatprep.subr.bf16.mxu0 0
    %774 = vmatpush1.bf16.msra.mxu0 %v757
    %775 = vmatprep.subr.bf16.mxu0 0
    %776 = vmatpush1.bf16.msra.mxu0 %v758
    %777 = vmatprep.subr.bf16.mxu0 0
    %778 = vmatpush1.bf16.msra.mxu0 %v759
    %779 = vmatprep.subr.bf16.mxu0 0
    %780 = vmatpush1.bf16.msra.mxu0 %v760
    %781 = vmatprep.subr.bf16.mxu0 0
    %782 = vmatpush1.bf16.msra.mxu0 %v761
    %783 = vmatprep.subr.bf16.mxu0 0
    %784 = vmatpush1.bf16.msra.mxu0 %v762
    %785 = vmatprep.subr.bf16.mxu0 0
    %786 = vmatpush1.bf16.msra.mxu0 %v763
    %787 = vmatprep.subr.bf16.mxu0 0
    %788 = vmatpush1.bf16.msra.mxu0 %v764
    %789 = vmatprep.subr.bf16.mxu0 0
    %790 = vmatpush1.bf16.msra.mxu0 0
    %791 = vmatprep.subr.bf16.mxu0 0
    %792 = vmatpush1.bf16.msra.mxu0 0
    %793 = vmatprep.subr.bf16.mxu0 0
    %794 = vmatpush1.bf16.msra.mxu0 0
    %795 = vmatprep.subr.bf16.mxu0 0
    %796 = vmatpush1.bf16.msra.mxu0 0
    %797 = vmatprep.subr.bf16.mxu0 0
    %798 = vmatpush1.bf16.msra.mxu0 0
    %799 = vmatprep.subr.bf16.mxu0 0
    %800 = vmatpush1.bf16.msra.mxu0 0
    %801 = vmatprep.subr.bf16.mxu0 0
    %802 = vmatpush1.bf16.msra.mxu0 0
    %803 = vmatprep.subr.bf16.mxu0 0
    %804 = vmatpush1.bf16.msra.mxu0 0
    %805 = vmatprep.mubr.bf16.mxu0 0
    %806 = vmatmul.mubr.bf16.gmra.mrb[0].mxu0 %v708
    %v807 = vpop.f32.mrb[0].mxu0
    %v808 = vadd.f32 0.0, %v807
    %v809 = vpop.f32.mrb[0].mxu0
    %v810 = vpop.f32.mrb[0].mxu0
    %v811 = vadd.f32 0.0, %v810
    %v812 = vpop.f32.mrb[0].mxu0
    %813 = vdwg.mxu0
    %v830 = vunpack.c.l.b16 %v692
    %v831 = vunpack.c.l.b16 %v693
    %v832 = vunpack.c.l.b16 %v694
    %v833 = vunpack.c.l.b16 %v695
    %v834 = vunpack.c.l.b16 %v696
    %v835 = vunpack.c.l.b16 %v697
    %v836 = vunpack.c.l.b16 %v698
    %v837 = vunpack.c.l.b16 %v699
    %v838 = vunpack.c.l.b16 %v700
    %v839 = vunpack.c.l.b16 %v701
    %v840 = vunpack.c.l.b16 %v702
    %v841 = vunpack.c.l.b16 %v703
    %v842 = vunpack.c.l.b16 %v704
    %v843 = vunpack.c.l.b16 %v705
    %v844 = vunpack.c.l.b16 %v706
    %v845 = vunpack.c.l.b16 %v707
    %v846 = vpack.c.b16 %v831, %v830
    %v847 = vpack.c.b16 %v833, %v832
    %v848 = vpack.c.b16 %v835, %v834
    %v849 = vpack.c.b16 %v837, %v836
    %v850 = vpack.c.b16 %v839, %v838
    %v851 = vpack.c.b16 %v841, %v840
    %v852 = vpack.c.b16 %v843, %v842
    %v853 = vpack.c.b16 %v845, %v844
    %862 = vmatprep.subr.bf16.mxu0 0
    %863 = vmatpush1.bf16.msra.mxu0 %v846
    %864 = vmatprep.subr.bf16.mxu0 0
    %865 = vmatpush1.bf16.msra.mxu0 %v847
    %866 = vmatprep.subr.bf16.mxu0 0
    %867 = vmatpush1.bf16.msra.mxu0 %v848
    %868 = vmatprep.subr.bf16.mxu0 0
    %869 = vmatpush1.bf16.msra.mxu0 %v849
    %870 = vmatprep.subr.bf16.mxu0 0
    %871 = vmatpush1.bf16.msra.mxu0 %v850
    %872 = vmatprep.subr.bf16.mxu0 0
    %873 = vmatpush1.bf16.msra.mxu0 %v851
    %874 = vmatprep.subr.bf16.mxu0 0
    %875 = vmatpush1.bf16.msra.mxu0 %v852
    %876 = vmatprep.subr.bf16.mxu0 0
    %877 = vmatpush1.bf16.msra.mxu0 %v853
    %878 = vmatprep.subr.bf16.mxu0 0
    %879 = vmatpush1.bf16.msra.mxu0 0
    %880 = vmatprep.subr.bf16.mxu0 0
    %881 = vmatpush1.bf16.msra.mxu0 0
    %882 = vmatprep.subr.bf16.mxu0 0
    %883 = vmatpush1.bf16.msra.mxu0 0
    %884 = vmatprep.subr.bf16.mxu0 0
    %885 = vmatpush1.bf16.msra.mxu0 0
    %886 = vmatprep.subr.bf16.mxu0 0
    %887 = vmatpush1.bf16.msra.mxu0 0
    %888 = vmatprep.subr.bf16.mxu0 0
    %889 = vmatpush1.bf16.msra.mxu0 0
    %890 = vmatprep.subr.bf16.mxu0 0
    %891 = vmatpush1.bf16.msra.mxu0 0
    %892 = vmatprep.subr.bf16.mxu0 0
    %893 = vmatpush1.bf16.msra.mxu0 0
    %894 = vmatprep.mubr.bf16.mxu0 0
    %895 = vmatmul.mubr.bf16.gmra.mrb[0].mxu0 %v691
    %v896 = vpop.f32.mrb[0].mxu0
    %v897 = vadd.f32 %v808, %v896
    %v898 = vpop.f32.mrb[0].mxu0
    %v899 = vpop.f32.mrb[0].mxu0
    %v900 = vadd.f32 %v811, %v899
    %v901 = vpop.f32.mrb[0].mxu0
    %902 = vdwg.mxu0
    %v903 = vld [vmem:[%s11] sm:$0x1]
    %v905 = vlaneseq
    %v906 = vshrl.u32 %v905, 7
    %v907 = vsub.s32 0, %v906
    %v908 = vrot.slane %v903, %v907
    %v910 = vadd.f32 %v897, %v908
    %v911 = vadd.f32 %v900, %v908
    %v912 = vld [vmem:[%s12] sm:$0x1]
    %v914 = vlaneseq
    %v915 = vshrl.u32 %v914, 7
    %v916 = vsub.s32 0, %v915
    %v917 = vrot.slane %v912, %v916
    %v919 = vmul.f32 %v384, %v917
    %v920 = vmul.f32 %v385, %v917
    %921 = vadd.xlane.f32.xlu0 %v919
    %v922 = vpop.xlane.xlu0 %921
    %923 = vadd.xlane.f32.xlu0 %v920
    %v924 = vpop.xlane.xlu0 %923
    %s925 = sld [smem:[#allocation2]]
    %v926 = vstv %s925
    %v927 = vadd.f32 %v922, %v926
    %v928 = vadd.f32 %v924, %v926
    %v929 = vxor.u32 %v927, 2147483648
    %v930 = vxor.u32 %v928, 2147483648
    %v931 = vmul.f32 %v929, 1.442695
    %v932 = vpow.pop %v931
    %v933 = vmul.f32 %v930, 1.442695
    %v934 = vpow.pop %v933
    %v935 = vadd.f32 %v932, 1.0
    %v936 = vadd.f32 %v934, 1.0
    %v937 = vrcp.pop %v935
    %v938 = vmul.f32 1.0, %v937
    %v939 = vrcp.pop %v936
    %v940 = vmul.f32 1.0, %v939
    %v941 = vmul.f32 %v938, %v159
    %v942 = vmul.f32 %v940, %v160
    %v943 = vsub.f32 1.0, %v938
    %v944 = vsub.f32 1.0, %v940
    %v945 = vmul.f32 %v943, %v910
    %v946 = vmul.f32 %v944, %v911
    %v947 = vadd.f32 %v941, %v945
    %v948 = vadd.f32 %v942, %v946
    %949 = vst [vmem:[#allocation17] sm:$0xff] %v947
    %950 = vst [vmem:[#allocation17 + $0x8] sm:$0xff] %v948
    // Predicated region
    $region90: #{tpu_custom_call.1} parent=1 // pred_check
      _
    $region91: #{tpu_custom_call.1} parent=1 // pred_check_branch
      %952 = sbr.rel (0) target = $region93
    $region92: #{tpu_custom_call.1} parent=1 // pred_region
      %s954 = ssub.s32 256, 256
      %955 = vsyncadd [#allocation5], %s954
      %s956 = sshll.u32 [#allocation17], 4
      %s957 = int_to_ptr.vmem [resolvable:$true] %s956
      %962 = dma.vmem_to_hbm [thread:$0]  %s957, 256, %s14, [#allocation5], 128, 128, 8
    $region93: #{tpu_custom_call.1} parent=1 // pred_fallthru
      _
    // Predicated region
    $region94: #{tpu_custom_call.1} parent=1 // pred_check
      _
    $region95: #{tpu_custom_call.1} parent=1 // pred_check_branch
      %964 = sbr.rel (0) target = $region97
    $region96: #{tpu_custom_call.1} parent=1 // pred_region
      %965 = dma.done [#allocation5], 256
    $region97: #{tpu_custom_call.1} parent=1 // pred_fallthru
      _
    %966 = vsyncpa [#allocation4], 1
    %967 = vsyncpa [#allocation7], 1
    %968 = vsyncpa [#allocation10], 1
    %969 = vsyncpa [#allocation13], 1
    %970 = vsyncpa [#allocation16], 1
    %971 = vsyncpa [#allocation5], 1

</llo_original>
